<compile_context>
chip_gen: v6e
topology: v6e:2x2x1
jax: 0.10.0
libtpu: 0.0.40
codegen_flags: <defaults>
</compile_context>

<pallas_src>
import functools

import jax
import jax.numpy as jnp
from jax.experimental import pallas as pl
from jax.experimental.pallas import tpu as pltpu

LANES = 128  # TPU lane width; all packed slabs are 128 lanes wide.


def _round_up(n, m):
    return (n + m - 1) // m * m


def vae_kernel(x_ref, eps_ref, w_ref, b_ref, out_ref, *, input_dim, latent_dim):
    # x_ref  : (TB, input_dim)   raw input rows
    # eps_ref: (TB, latent_dim)  standard-normal noise
    # w_ref  : (512, 128) f32    layer j weights at rows [128*j : 128*(j+1)], zero-padded
    # b_ref  : (32, 128)  f32    layer j bias at row 8*j, zero-padded to 128 lanes
    # out_ref: (TB, 128)         lanes [x_dec | mu | log_var | z | 0-pad]
    x = x_ref[...]                                      # (TB, input_dim)
    eps = eps_ref[...]                                  # (TB, latent_dim)

    # Full-lane-width weight tiles (N = 128 everywhere); only K is sublane-sliced
    # (8-aligned, starts at a 128-row tile boundary) when the LHS is narrow.
    w_enc = w_ref[0 * LANES:0 * LANES + input_dim, :]   # (input_dim, 128)
    w_head = w_ref[1 * LANES:2 * LANES, :]              # (128, 128)  fused mu|var head
    w_dec = w_ref[2 * LANES:2 * LANES + latent_dim, :]  # (latent_dim, 128)
    w_out = w_ref[3 * LANES:4 * LANES, :]               # (128, 128)

    b_enc = b_ref[0:1, :]                               # (1, 128)
    b_head = b_ref[8:9, :]
    b_dec = b_ref[16:17, :]
    b_out = b_ref[24:25, :]

    # ---- Encoder ----  (h lanes >= hidden_dim are exactly 0: zero weight cols + zero bias)
    h = jnp.maximum(
        jnp.dot(x, w_enc, preferred_element_type=jnp.float32) + b_enc, 0.0)     # (TB, 128)
    head = jnp.dot(h, w_head, preferred_element_type=jnp.float32) + b_head      # (TB, 128)
    mu = head[:, 0:latent_dim]
    log_var = head[:, latent_dim:2 * latent_dim]

    # ---- Reparameterization: z = mu + exp(log_var / 2) * eps ----
    z = mu + jnp.exp(log_var * 0.5) * eps                                        # (TB, L)

    # ---- Decoder ----
    hd = jnp.maximum(
        jnp.dot(z, w_dec, preferred_element_type=jnp.float32) + b_dec, 0.0)      # (TB, 128)
    x_dec_full = jax.nn.sigmoid(
        jnp.dot(hd, w_out, preferred_element_type=jnp.float32) + b_out)          # (TB, 128)
    x_dec = x_dec_full[:, 0:input_dim]

    # ---- Pack outputs into one lane-dense slab: single unmasked 128-lane store ----
    pad = LANES - (input_dim + 3 * latent_dim)
    pieces = [x_dec, mu, log_var, z]
    if pad > 0:
        pieces.append(jnp.zeros((x_dec.shape[0], pad), jnp.float32))
    out_ref[...] = jnp.concatenate(pieces, axis=-1).astype(out_ref.dtype)


def pack_vae_params(params):
    """One-time parameter prep: pack weights/biases into full-width MXU tiles."""
    input_dim, hidden_dim = params["w_enc"].shape
    latent_dim = params["w_mu"].shape[1]

    assert input_dim + 3 * latent_dim <= LANES, "packed output slab assumes <= 128 lanes"
    assert max(input_dim, hidden_dim, 2 * latent_dim) <= LANES
    # Layout assumption from the review: all feature dims must be multiples of 8.
    assert input_dim % 8 == 0 and hidden_dim % 8 == 0 and latent_dim % 8 == 0

    # (512, 128) weight slab: layer j at rows 128*j, zero-padded to a full 128x128 tile.
    w_head = jnp.concatenate([params["w_mu"], params["w_var"]], axis=1)  # fused mu|var head
    weight_list = (params["w_enc"], w_head, params["w_dec"], params["w_out"])
    w_all = jnp.zeros((4 * LANES, LANES), jnp.float32)
    for j, wmat in enumerate(weight_list):
        ri, ro = wmat.shape
        w_all = w_all.at[j * LANES:j * LANES + ri, :ro].set(wmat.astype(jnp.float32))

    # (32, 128) bias slab: layer j bias at row 8*j, zero-padded to 128 lanes.
    b_head = jnp.concatenate([params["b_mu"], params["b_var"]], axis=1)
    bias_list = (params["b_enc"], b_head, params["b_dec"], params["b_out"])
    b_all = jnp.zeros((32, LANES), jnp.float32)
    for j, bvec in enumerate(bias_list):
        b_all = b_all.at[8 * j:8 * j + 1, :bvec.shape[1]].set(bvec.astype(jnp.float32))

    return {
        "w_all": w_all, "b_all": b_all,
        "input_dim": input_dim, "hidden_dim": hidden_dim, "latent_dim": latent_dim,
    }


def vae_forward(x, eps, packed, *, batch_tile=512):
    """x: (B, input_dim) f32, eps: (B, latent_dim) f32.

    Returns the packed (B_pad, 128) output slab: lanes [x_dec | mu | log_var | z | 0].
    Slice lazily at the consumer (see unpack_vae_outputs).
    """
    B, input_dim = x.shape
    latent_dim = eps.shape[1]
    assert input_dim == packed["input_dim"] and latent_dim == packed["latent_dim"]

    # One big batch tile (512-1024 rows reaches ~85% of HBM roofline; whole working
    # set is << VMEM on v5e/v6e/v7x).  grid=(1,) for the demo batch.
    tb = min(batch_tile, _round_up(B, 8))
    b_pad = _round_up(B, tb)
    nb = b_pad // tb

    x32 = x.astype(jnp.float32)
    eps32 = eps.astype(jnp.float32)
    if b_pad != B:
        x32 = jnp.pad(x32, ((0, b_pad - B), (0, 0)))
        eps32 = jnp.pad(eps32, ((0, b_pad - B), (0, 0)))

    w_all = packed["w_all"]
    b_all = packed["b_all"]

    kernel = functools.partial(vae_kernel, input_dim=input_dim, latent_dim=latent_dim)

    flops = 2 * b_pad * (input_dim * LANES + LANES * LANES + latent_dim * LANES + LANES * LANES)
    transcendentals = b_pad * (latent_dim + LANES)  # exp + sigmoid
    bytes_accessed = 4 * (x32.size + eps32.size + w_all.size + b_all.size + b_pad * LANES)

    # Batch tiles are independent; with nb == 1 there is nothing to pipeline.
    # TODO(synk): use pltpu.CORE_PARALLEL on the batch axis for v7x multi-TC splits.
    dim_sem = ("arbitrary",) if nb == 1 else ("parallel",)

    out_slab = pl.pallas_call(
        kernel,
        out_shape=jax.ShapeDtypeStruct((b_pad, LANES), jnp.float32),
        grid=(nb,),
        in_specs=[
            pl.BlockSpec((tb, input_dim), lambda i: (i, 0)),        # x rows
            pl.BlockSpec((tb, latent_dim), lambda i: (i, 0)),       # eps rows
            pl.BlockSpec((4 * LANES, LANES), lambda i: (0, 0)),     # resident weight slab
            pl.BlockSpec((32, LANES), lambda i: (0, 0)),            # resident bias slab
        ],
        out_specs=pl.BlockSpec((tb, LANES), lambda i: (i, 0)),
        compiler_params=pltpu.CompilerParams(dimension_semantics=dim_sem),
        cost_estimate=pl.CostEstimate(
            flops=int(flops),
            transcendentals=int(transcendentals),
            bytes_accessed=int(bytes_accessed)),
    )(x32, eps32, w_all, b_all)

    return out_slab


def unpack_vae_outputs(out_slab, B, input_dim, latent_dim):
    """Lazy consumer-side slicing of the packed output slab."""
    x_dec = out_slab[:B, 0:input_dim]
    mu = out_slab[:B, input_dim:input_dim + latent_dim]
    log_var = out_slab[:B, input_dim + latent_dim:input_dim + 2 * latent_dim]
    z = out_slab[:B, input_dim + 2 * latent_dim:input_dim + 3 * latent_dim]
    return x_dec, mu, log_var, z


def init_params(key, input_dim, hidden_dim, latent_dim):
    """Deterministic synthetic parameters. Weights stored already-transposed: (in, out)."""
    ks = jax.random.split(key, 10)
    scale = 0.1

    def w(k, fan_in, fan_out):
        return (scale * jax.random.normal(k, (fan_in, fan_out))).astype(jnp.float32)

    def b(k, fan_out):
        return (scale * jax.random.normal(k, (1, fan_out))).astype(jnp.float32)

    return {
        # encoder
        "w_enc": w(ks[0], input_dim, hidden_dim), "b_enc": b(ks[1], hidden_dim),
        "w_mu":  w(ks[2], hidden_dim, latent_dim), "b_mu":  b(ks[3], latent_dim),
        "w_var": w(ks[4], hidden_dim, latent_dim), "b_var": b(ks[5], latent_dim),
        # decoder
        "w_dec": w(ks[6], latent_dim, hidden_dim), "b_dec": b(ks[7], hidden_dim),
        "w_out": w(ks[8], hidden_dim, input_dim),  "b_out": b(ks[9], input_dim),
    }


def vae_reference(x, eps, params):
    """Plain-JAX reference for correctness check."""
    h = jnp.maximum(x @ params["w_enc"] + params["b_enc"], 0.0)
    mu = h @ params["w_mu"] + params["b_mu"]
    log_var = h @ params["w_var"] + params["b_var"]
    z = mu + jnp.exp(log_var * 0.5) * eps
    hd = jnp.maximum(z @ params["w_dec"] + params["b_dec"], 0.0)
    x_dec = jax.nn.sigmoid(hd @ params["w_out"] + params["b_out"])
    return x_dec, mu, log_var, z


if __name__ == "__main__":
    # B = 256 so the single batch tile feeds >= 256 MXU rows per matmul and the whole
    # forward pass is one grid step.
    B, input_dim, hidden_dim, latent_dim = 256, 64, 32, 16

    key = jax.random.PRNGKey(0)
    k_x, k_eps, k_params = jax.random.split(key, 3)

    x = jax.random.uniform(k_x, (B, input_dim), dtype=jnp.float32)
    # torch.randn_like equivalent: standard-normal noise for the latent, generated here.
    eps = jax.random.normal(k_eps, (B, latent_dim), dtype=jnp.float32)
    params = init_params(k_params, input_dim, hidden_dim, latent_dim)

    packed = pack_vae_params(params)          # one-time parameter prep
    out_slab = vae_forward(x, eps, packed)
    out_slab = jax.block_until_ready(out_slab)

    outs = unpack_vae_outputs(out_slab, B, input_dim, latent_dim)
    refs = vae_reference(x, eps, params)
    for got, want in zip(outs, refs):
        assert got.shape == want.shape and got.dtype == want.dtype
        assert jnp.max(jnp.abs(got - want)) < 1e-4

    print("KERNEL_OK")
</pallas_src>

<mosaic_0001>
module attributes {stable_mosaic.version = 11 : i64} {
  func.func @vae_kernel(%arg0: i32, %arg1: memref<256x64xf32, #tpu.memory_space<vmem>>, %arg2: memref<256x16xf32, #tpu.memory_space<vmem>>, %arg3: memref<512x128xf32, #tpu.memory_space<vmem>>, %arg4: memref<32x128xf32, #tpu.memory_space<vmem>>, %arg5: memref<256x128xf32, #tpu.memory_space<vmem>>) attributes {dimension_semantics = [#tpu.dimension_semantics<arbitrary>], iteration_bounds = array<i64: 1>, scalar_prefetch = 0 : i64, scratch_operands = 0 : i64, tpu.core_type = #tpu.core_type<tc>, window_params = [{transform_indices = @transform_0, window_bounds = array<i64: 256, 64>}, {transform_indices = @transform_1, window_bounds = array<i64: 256, 16>}, {pipeline_mode = #tpu.pipeline_mode<synchronous>, transform_indices = @transform_2, window_bounds = array<i64: 512, 128>}, {pipeline_mode = #tpu.pipeline_mode<synchronous>, transform_indices = @transform_3, window_bounds = array<i64: 32, 128>}, {transform_indices = @transform_4, window_bounds = array<i64: 256, 128>}]} {
    %c0 = arith.constant 0 : index
    %c0_0 = arith.constant 0 : index
    %0 = vector.load %arg1[%c0, %c0_0] : memref<256x64xf32, #tpu.memory_space<vmem>>, vector<256x64xf32>
    %c0_1 = arith.constant 0 : index
    %c0_2 = arith.constant 0 : index
    %1 = vector.load %arg2[%c0_1, %c0_2] : memref<256x16xf32, #tpu.memory_space<vmem>>, vector<256x16xf32>
    %c0_3 = arith.constant 0 : index
    %c0_4 = arith.constant 0 : index
    %2 = vector.load %arg3[%c0_3, %c0_4] : memref<512x128xf32, #tpu.memory_space<vmem>>, vector<64x128xf32>
    %c128 = arith.constant 128 : index
    %c0_5 = arith.constant 0 : index
    %3 = vector.load %arg3[%c128, %c0_5] : memref<512x128xf32, #tpu.memory_space<vmem>>, vector<128x128xf32>
    %c256 = arith.constant 256 : index
    %c0_6 = arith.constant 0 : index
    %4 = vector.load %arg3[%c256, %c0_6] : memref<512x128xf32, #tpu.memory_space<vmem>>, vector<16x128xf32>
    %c384 = arith.constant 384 : index
    %c0_7 = arith.constant 0 : index
    %5 = vector.load %arg3[%c384, %c0_7] : memref<512x128xf32, #tpu.memory_space<vmem>>, vector<128x128xf32>
    %c0_8 = arith.constant 0 : index
    %c0_9 = arith.constant 0 : index
    %6 = vector.load %arg4[%c0_8, %c0_9] : memref<32x128xf32, #tpu.memory_space<vmem>>, vector<1x128xf32>
    %c8 = arith.constant 8 : index
    %c0_10 = arith.constant 0 : index
    %7 = vector.load %arg4[%c8, %c0_10] : memref<32x128xf32, #tpu.memory_space<vmem>>, vector<1x128xf32>
    %c16 = arith.constant 16 : index
    %c0_11 = arith.constant 0 : index
    %8 = vector.load %arg4[%c16, %c0_11] : memref<32x128xf32, #tpu.memory_space<vmem>>, vector<1x128xf32>
    %c24 = arith.constant 24 : index
    %c0_12 = arith.constant 0 : index
    %9 = vector.load %arg4[%c24, %c0_12] : memref<32x128xf32, #tpu.memory_space<vmem>>, vector<1x128xf32>
    %cst = arith.constant dense<0.000000e+00> : vector<256x128xf32>
    %10 = tpu.matmul %0, %2, %cst {dimension_numbers = #tpu.dot_dimension_numbers<[1], [0], [0], [1], [0, 0, 1, 1], [], []>} : vector<256x64xf32>, vector<64x128xf32>, vector<256x128xf32> -> vector<256x128xf32>
    %11 = vector.broadcast %6 : vector<1x128xf32> to vector<256x128xf32>
    %12 = arith.addf %10, %11 : vector<256x128xf32>
    %cst_13 = arith.constant 0.000000e+00 : f32
    %13 = vector.broadcast %cst_13 : f32 to vector<256x128xf32>
    %14 = arith.maximumf %12, %13 : vector<256x128xf32>
    %cst_14 = arith.constant dense<0.000000e+00> : vector<256x128xf32>
    %15 = tpu.matmul %14, %3, %cst_14 {dimension_numbers = #tpu.dot_dimension_numbers<[1], [0], [0], [1], [0, 0, 1, 1], [], []>} : vector<256x128xf32>, vector<128x128xf32>, vector<256x128xf32> -> vector<256x128xf32>
    %16 = vector.broadcast %7 : vector<1x128xf32> to vector<256x128xf32>
    %17 = arith.addf %15, %16 : vector<256x128xf32>
    %18 = vector.extract_strided_slice %17 {offsets = [0, 0], sizes = [256, 16], strides = [1, 1]} : vector<256x128xf32> to vector<256x16xf32>
    %19 = vector.extract_strided_slice %17 {offsets = [0, 16], sizes = [256, 16], strides = [1, 1]} : vector<256x128xf32> to vector<256x16xf32>
    %cst_15 = arith.constant 5.000000e-01 : f32
    %20 = vector.broadcast %cst_15 : f32 to vector<256x16xf32>
    %21 = arith.mulf %19, %20 : vector<256x16xf32>
    %22 = math.exp %21 : vector<256x16xf32>
    %23 = arith.mulf %22, %1 : vector<256x16xf32>
    %24 = arith.addf %18, %23 : vector<256x16xf32>
    %cst_16 = arith.constant dense<0.000000e+00> : vector<256x128xf32>
    %25 = tpu.matmul %24, %4, %cst_16 {dimension_numbers = #tpu.dot_dimension_numbers<[1], [0], [0], [1], [0, 0, 1, 1], [], []>} : vector<256x16xf32>, vector<16x128xf32>, vector<256x128xf32> -> vector<256x128xf32>
    %26 = vector.broadcast %8 : vector<1x128xf32> to vector<256x128xf32>
    %27 = arith.addf %25, %26 : vector<256x128xf32>
    %cst_17 = arith.constant 0.000000e+00 : f32
    %28 = vector.broadcast %cst_17 : f32 to vector<256x128xf32>
    %29 = arith.maximumf %27, %28 : vector<256x128xf32>
    %cst_18 = arith.constant dense<0.000000e+00> : vector<256x128xf32>
    %30 = tpu.matmul %29, %5, %cst_18 {dimension_numbers = #tpu.dot_dimension_numbers<[1], [0], [0], [1], [0, 0, 1, 1], [], []>} : vector<256x128xf32>, vector<128x128xf32>, vector<256x128xf32> -> vector<256x128xf32>
    %31 = vector.broadcast %9 : vector<1x128xf32> to vector<256x128xf32>
    %32 = arith.addf %30, %31 : vector<256x128xf32>
    %33 = arith.negf %32 : vector<256x128xf32>
    %34 = math.exp %33 : vector<256x128xf32>
    %cst_19 = arith.constant 1.000000e+00 : f32
    %35 = vector.broadcast %cst_19 : f32 to vector<256x128xf32>
    %36 = arith.addf %35, %34 : vector<256x128xf32>
    %37 = arith.divf %35, %36 : vector<256x128xf32>
    %38 = vector.extract_strided_slice %37 {offsets = [0, 0], sizes = [256, 64], strides = [1, 1]} : vector<256x128xf32> to vector<256x64xf32>
    %cst_20 = arith.constant 0.000000e+00 : f32
    %39 = vector.broadcast %cst_20 : f32 to vector<256x16xf32>
    %40 = tpu.concatenate %38, %18, %19, %24, %39 in 1 : vector<256x64xf32>, vector<256x16xf32>, vector<256x16xf32>, vector<256x16xf32>, vector<256x16xf32> -> vector<256x128xf32>
    %c0_21 = arith.constant 0 : index
    %c0_22 = arith.constant 0 : index
    %41 = vector.load %arg5[%c0_21, %c0_22] : memref<256x128xf32, #tpu.memory_space<vmem>>, vector<256x128xf32>
    tpu.vector_store %arg5[%c0_21, %c0_22], %40 {strides = array<i32>} : memref<256x128xf32, #tpu.memory_space<vmem>>, vector<256x128xf32>,
    return
  }
  func.func @transform_0(%arg0: i32) -> (i32, i32) {
    %c0_i32 = arith.constant 0 : i32
    %c0_i32_0 = arith.constant 0 : i32
    return %arg0, %c0_i32 : i32, i32
  }
  func.func @transform_1(%arg0: i32) -> (i32, i32) {
    %c0_i32 = arith.constant 0 : i32
    %c0_i32_0 = arith.constant 0 : i32
    return %arg0, %c0_i32 : i32, i32
  }
  func.func @transform_2(%arg0: i32) -> (i32, i32) {
    %c0_i32 = arith.constant 0 : i32
    %c0_i32_0 = arith.constant 0 : i32
    %c0_i32_1 = arith.constant 0 : i32
    return %c0_i32, %c0_i32_0 : i32, i32
  }
  func.func @transform_3(%arg0: i32) -> (i32, i32) {
    %c0_i32 = arith.constant 0 : i32
    %c0_i32_0 = arith.constant 0 : i32
    %c0_i32_1 = arith.constant 0 : i32
    return %c0_i32, %c0_i32_0 : i32, i32
  }
  func.func @transform_4(%arg0: i32) -> (i32, i32) {
    %c0_i32 = arith.constant 0 : i32
    %c0_i32_0 = arith.constant 0 : i32
    return %arg0, %c0_i32 : i32, i32
  }
}

</mosaic_0001>

<llo_original>
// kernel: tpu_custom_call.1
$region0: #{tpu_custom_call.1}
  #allocation0 [shape = 'u32[]', space=smem, size = 0x4, offset = 0x4, fixed_abs, tag = 'smem constant byte address 0x4 - core index']
  #allocation1 [shape = 'u32[144,128]{1,0:T(1,128)}', space=vmem, size = 0x12000, scoped, tag = 'internal scratch']
  %s0 = inlined_call_operand.vmem [shape: f32[256,64], index: 0, kind: input, shape index: {}]
  %s1 = inlined_call_operand.vmem [shape: f32[256,16], index: 1, kind: input, shape index: {}]
  %s2 = inlined_call_operand.vmem [shape: f32[512,128], index: 2, kind: input, shape index: {}]
  %s3 = inlined_call_operand.vmem [shape: f32[32,128], index: 3, kind: input, shape index: {}]
  %s4 = inlined_call_operand.hbm [shape: f32[256,128], index: 4, kind: output, shape index: {}]
  %s5 = sld [smem:[#allocation0]]
  $region26: #{tpu_custom_call.1} parent=0
    _
  %s7 = ssub.s32 1, %s5
  %s8 = scalar_select 0, %s7, %s5
  $region1: #{tpu_custom_call.1} parent=0
    #allocation2 [shape = 'u8[131072]{0}', space=vmem, size = 0x20000, scoped, tag = 'output window, operand 0, single buffered']
    #allocation3 [shape = 's32[1]{0}', space=sflag, size = 0x4, scoped, tag = 'scoped memory for tpu_custom_call.1']
    %9 = vsyncpa [#allocation3], 0
    // Predicated region
    $region2: #{tpu_custom_call.1} parent=1 // pred_check
      _
    $region3: #{tpu_custom_call.1} parent=1 // pred_check_branch
      %11 = sbr.rel (0) target = $region5
    $region4: #{tpu_custom_call.1} parent=1 // pred_region
      _
    $region5: #{tpu_custom_call.1} parent=1 // pred_fallthru
      _
    // Predicated region
    $region6: #{tpu_custom_call.1} parent=1 // pred_check
      _
    $region7: #{tpu_custom_call.1} parent=1 // pred_check_branch
      %13 = sbr.rel (0) target = $region9
    $region8: #{tpu_custom_call.1} parent=1 // pred_region
      _
    $region9: #{tpu_custom_call.1} parent=1 // pred_fallthru
      _
    // Predicated region
    $region10: #{tpu_custom_call.1} parent=1 // pred_check
      _
    $region11: #{tpu_custom_call.1} parent=1 // pred_check_branch
      %15 = sbr.rel (0) target = $region13
    $region12: #{tpu_custom_call.1} parent=1 // pred_region
      _
    $region13: #{tpu_custom_call.1} parent=1 // pred_fallthru
      _
    // Predicated region
    $region14: #{tpu_custom_call.1} parent=1 // pred_check
      _
    $region15: #{tpu_custom_call.1} parent=1 // pred_check_branch
      %17 = sbr.rel (0) target = $region17
    $region16: #{tpu_custom_call.1} parent=1 // pred_region
      _
    $region17: #{tpu_custom_call.1} parent=1 // pred_fallthru
      _
    %v18 = vld [vmem:[%s0] sm:$0xff]
    %v19 = vld [vmem:[%s0 + $0x8] sm:$0xff]
    %v20 = vld [vmem:[%s0 + $0x10] sm:$0xff]
    %v21 = vld [vmem:[%s0 + $0x18] sm:$0xff]
    %v22 = vld [vmem:[%s0 + $0x20] sm:$0xff]
    %v23 = vld [vmem:[%s0 + $0x28] sm:$0xff]
    %v24 = vld [vmem:[%s0 + $0x30] sm:$0xff]
    %v25 = vld [vmem:[%s0 + $0x38] sm:$0xff]
    %v26 = vld [vmem:[%s0 + $0x40] sm:$0xff]
    %v27 = vld [vmem:[%s0 + $0x48] sm:$0xff]
    %v28 = vld [vmem:[%s0 + $0x50] sm:$0xff]
    %v29 = vld [vmem:[%s0 + $0x58] sm:$0xff]
    %v30 = vld [vmem:[%s0 + $0x60] sm:$0xff]
    %v31 = vld [vmem:[%s0 + $0x68] sm:$0xff]
    %v32 = vld [vmem:[%s0 + $0x70] sm:$0xff]
    %v33 = vld [vmem:[%s0 + $0x78] sm:$0xff]
    %v34 = vld [vmem:[%s0 + $0x80] sm:$0xff]
    %v35 = vld [vmem:[%s0 + $0x88] sm:$0xff]
    %v36 = vld [vmem:[%s0 + $0x90] sm:$0xff]
    %v37 = vld [vmem:[%s0 + $0x98] sm:$0xff]
    %v38 = vld [vmem:[%s0 + $0xa0] sm:$0xff]
    %v39 = vld [vmem:[%s0 + $0xa8] sm:$0xff]
    %v40 = vld [vmem:[%s0 + $0xb0] sm:$0xff]
    %v41 = vld [vmem:[%s0 + $0xb8] sm:$0xff]
    %v42 = vld [vmem:[%s0 + $0xc0] sm:$0xff]
    %v43 = vld [vmem:[%s0 + $0xc8] sm:$0xff]
    %v44 = vld [vmem:[%s0 + $0xd0] sm:$0xff]
    %v45 = vld [vmem:[%s0 + $0xd8] sm:$0xff]
    %v46 = vld [vmem:[%s0 + $0xe0] sm:$0xff]
    %v47 = vld [vmem:[%s0 + $0xe8] sm:$0xff]
    %v48 = vld [vmem:[%s0 + $0xf0] sm:$0xff]
    %v49 = vld [vmem:[%s0 + $0xf8] sm:$0xff]
    %v50 = vld [vmem:[%s1] sm:$0xff]
    %v51 = vld [vmem:[%s1 + $0x8] sm:$0xff]
    %v52 = vld [vmem:[%s1 + $0x10] sm:$0xff]
    %v53 = vld [vmem:[%s1 + $0x18] sm:$0xff]
    %v54 = vld [vmem:[%s1 + $0x20] sm:$0xff]
    %v55 = vld [vmem:[%s1 + $0x28] sm:$0xff]
    %v56 = vld [vmem:[%s1 + $0x30] sm:$0xff]
    %v57 = vld [vmem:[%s1 + $0x38] sm:$0xff]
    %v58 = vld [vmem:[%s1 + $0x40] sm:$0xff]
    %v59 = vld [vmem:[%s1 + $0x48] sm:$0xff]
    %v60 = vld [vmem:[%s1 + $0x50] sm:$0xff]
    %v61 = vld [vmem:[%s1 + $0x58] sm:$0xff]
    %v62 = vld [vmem:[%s1 + $0x60] sm:$0xff]
    %v63 = vld [vmem:[%s1 + $0x68] sm:$0xff]
    %v64 = vld [vmem:[%s1 + $0x70] sm:$0xff]
    %v65 = vld [vmem:[%s1 + $0x78] sm:$0xff]
    %v66 = vld [vmem:[%s1 + $0x80] sm:$0xff]
    %v67 = vld [vmem:[%s1 + $0x88] sm:$0xff]
    %v68 = vld [vmem:[%s1 + $0x90] sm:$0xff]
    %v69 = vld [vmem:[%s1 + $0x98] sm:$0xff]
    %v70 = vld [vmem:[%s1 + $0xa0] sm:$0xff]
    %v71 = vld [vmem:[%s1 + $0xa8] sm:$0xff]
    %v72 = vld [vmem:[%s1 + $0xb0] sm:$0xff]
    %v73 = vld [vmem:[%s1 + $0xb8] sm:$0xff]
    %v74 = vld [vmem:[%s1 + $0xc0] sm:$0xff]
    %v75 = vld [vmem:[%s1 + $0xc8] sm:$0xff]
    %v76 = vld [vmem:[%s1 + $0xd0] sm:$0xff]
    %v77 = vld [vmem:[%s1 + $0xd8] sm:$0xff]
    %v78 = vld [vmem:[%s1 + $0xe0] sm:$0xff]
    %v79 = vld [vmem:[%s1 + $0xe8] sm:$0xff]
    %v80 = vld [vmem:[%s1 + $0xf0] sm:$0xff]
    %v81 = vld [vmem:[%s1 + $0xf8] sm:$0xff]
    %v82 = vld [vmem:[%s2] sm:$0xff]
    %v83 = vld [vmem:[%s2 + $0x8] sm:$0xff]
    %v84 = vld [vmem:[%s2 + $0x10] sm:$0xff]
    %v85 = vld [vmem:[%s2 + $0x18] sm:$0xff]
    %v86 = vld [vmem:[%s2 + $0x20] sm:$0xff]
    %v87 = vld [vmem:[%s2 + $0x28] sm:$0xff]
    %v88 = vld [vmem:[%s2 + $0x30] sm:$0xff]
    %v89 = vld [vmem:[%s2 + $0x38] sm:$0xff]
    %v90 = vld [vmem:[%s2 + $0x80] sm:$0xff]
    %v91 = vld [vmem:[%s2 + $0x88] sm:$0xff]
    %v92 = vld [vmem:[%s2 + $0x90] sm:$0xff]
    %v93 = vld [vmem:[%s2 + $0x98] sm:$0xff]
    %v94 = vld [vmem:[%s2 + $0xa0] sm:$0xff]
    %v95 = vld [vmem:[%s2 + $0xa8] sm:$0xff]
    %v96 = vld [vmem:[%s2 + $0xb0] sm:$0xff]
    %v97 = vld [vmem:[%s2 + $0xb8] sm:$0xff]
    %v98 = vld [vmem:[%s2 + $0xc0] sm:$0xff]
    %v99 = vld [vmem:[%s2 + $0xc8] sm:$0xff]
    %v100 = vld [vmem:[%s2 + $0xd0] sm:$0xff]
    %v101 = vld [vmem:[%s2 + $0xd8] sm:$0xff]
    %v102 = vld [vmem:[%s2 + $0xe0] sm:$0xff]
    %v103 = vld [vmem:[%s2 + $0xe8] sm:$0xff]
    %v104 = vld [vmem:[%s2 + $0xf0] sm:$0xff]
    %v105 = vld [vmem:[%s2 + $0xf8] sm:$0xff]
    %v106 = vld [vmem:[%s2 + $0x100] sm:$0xff]
    %v107 = vld [vmem:[%s2 + $0x108] sm:$0xff]
    %v108 = vld [vmem:[%s2 + $0x180] sm:$0xff]
    %v109 = vld [vmem:[%s2 + $0x188] sm:$0xff]
    %v110 = vld [vmem:[%s2 + $0x190] sm:$0xff]
    %v111 = vld [vmem:[%s2 + $0x198] sm:$0xff]
    %v112 = vld [vmem:[%s2 + $0x1a0] sm:$0xff]
    %v113 = vld [vmem:[%s2 + $0x1a8] sm:$0xff]
    %v114 = vld [vmem:[%s2 + $0x1b0] sm:$0xff]
    %v115 = vld [vmem:[%s2 + $0x1b8] sm:$0xff]
    %v116 = vld [vmem:[%s2 + $0x1c0] sm:$0xff]
    %v117 = vld [vmem:[%s2 + $0x1c8] sm:$0xff]
    %v118 = vld [vmem:[%s2 + $0x1d0] sm:$0xff]
    %v119 = vld [vmem:[%s2 + $0x1d8] sm:$0xff]
    %v120 = vld [vmem:[%s2 + $0x1e0] sm:$0xff]
    %v121 = vld [vmem:[%s2 + $0x1e8] sm:$0xff]
    %v122 = vld [vmem:[%s2 + $0x1f0] sm:$0xff]
    %v123 = vld [vmem:[%s2 + $0x1f8] sm:$0xff]
    %v124 = vld [vmem:[%s3] sm:$0x1]
    %v125 = vld [vmem:[%s3 + $0x8] sm:$0x1]
    %v126 = vld [vmem:[%s3 + $0x10] sm:$0x1]
    %v127 = vld [vmem:[%s3 + $0x18] sm:$0x1]
    %v128 = vlaneseq
    %v129 = vshrl.u32 %v128, 7
    %v130 = vsub.s32 0, %v129
    %v131 = vrot.slane %v124, %v130
    %vm132 = vcmask 523264
    %v134 = vsel %vm132, %v18, 0
    %v137 = vsel %vm132, %v19, 0
    %v140 = vsel %vm132, %v20, 0
    %v143 = vsel %vm132, %v21, 0
    %v146 = vsel %vm132, %v22, 0
    %v149 = vsel %vm132, %v23, 0
    %v152 = vsel %vm132, %v24, 0
    %v155 = vsel %vm132, %v25, 0
    %v158 = vsel %vm132, %v26, 0
    %v161 = vsel %vm132, %v27, 0
    %v164 = vsel %vm132, %v28, 0
    %v167 = vsel %vm132, %v29, 0
    %v170 = vsel %vm132, %v30, 0
    %v173 = vsel %vm132, %v31, 0
    %v176 = vsel %vm132, %v32, 0
    %v179 = vsel %vm132, %v33, 0
    %v182 = vsel %vm132, %v34, 0
    %v185 = vsel %vm132, %v35, 0
    %v188 = vsel %vm132, %v36, 0
    %v191 = vsel %vm132, %v37, 0
    %v194 = vsel %vm132, %v38, 0
    %v197 = vsel %vm132, %v39, 0
    %v200 = vsel %vm132, %v40, 0
    %v203 = vsel %vm132, %v41, 0
    %v206 = vsel %vm132, %v42, 0
    %v209 = vsel %vm132, %v43, 0
    %v212 = vsel %vm132, %v44, 0
    %v215 = vsel %vm132, %v45, 0
    %v218 = vsel %vm132, %v46, 0
    %v221 = vsel %vm132, %v47, 0
    %v224 = vsel %vm132, %v48, 0
    %v227 = vsel %vm132, %v49, 0
    %229 = vmatprep.subr.mxu0 0.0
    %230 = vmatpush1.msra.mxu0 0.0
    %231 = vmatprep.subr.mxu0 0.0
    %232 = vmatpush1.msra.mxu0 0.0
    %233 = vmatprep.subr.mxu0 0.0
    %234 = vmatpush1.msra.mxu0 0.0
    %235 = vmatprep.subr.mxu0 0.0
    %236 = vmatpush1.msra.mxu0 0.0
    %237 = vmatprep.subr.mxu0 0.0
    %238 = vmatpush1.msra.mxu0 0.0
    %239 = vmatprep.subr.mxu0 0.0
    %240 = vmatpush1.msra.mxu0 0.0
    %241 = vmatprep.subr.mxu0 0.0
    %242 = vmatpush1.msra.mxu0 0.0
    %243 = vmatprep.subr.mxu0 0.0
    %244 = vmatpush1.msra.mxu0 0.0
    %245 = vmatprep.subr.mxu0 0.0
    %246 = vmatpush1.msra.mxu0 %v89
    %247 = vmatprep.subr.mxu0 0.0
    %248 = vmatpush1.msra.mxu0 %v88
    %249 = vmatprep.subr.mxu0 0.0
    %250 = vmatpush1.msra.mxu0 %v87
    %251 = vmatprep.subr.mxu0 0.0
    %252 = vmatpush1.msra.mxu0 %v86
    %253 = vmatprep.subr.mxu0 0.0
    %254 = vmatpush1.msra.mxu0 %v85
    %255 = vmatprep.subr.mxu0 0.0
    %256 = vmatpush1.msra.mxu0 %v84
    %257 = vmatprep.subr.mxu0 0.0
    %258 = vmatpush1.msra.mxu0 %v83
    %259 = vmatprep.subr.mxu0 0.0
    %260 = vmatpush1.msra.mxu0 %v82
    %261 = vmatprep.subr.mxu0 0.0
    %262 = vmatpush2.msra.mxu0 0.0
    %263 = vmatprep.subr.mxu0 0.0
    %264 = vmatpush2.msra.mxu0 0.0
    %265 = vmatprep.subr.mxu0 0.0
    %266 = vmatpush2.msra.mxu0 0.0
    %267 = vmatprep.subr.mxu0 0.0
    %268 = vmatpush2.msra.mxu0 0.0
    %269 = vmatprep.subr.mxu0 0.0
    %270 = vmatpush2.msra.mxu0 0.0
    %271 = vmatprep.subr.mxu0 0.0
    %272 = vmatpush2.msra.mxu0 0.0
    %273 = vmatprep.subr.mxu0 0.0
    %274 = vmatpush2.msra.mxu0 0.0
    %275 = vmatprep.subr.mxu0 0.0
    %276 = vmatpush2.msra.mxu0 0.0
    %277 = vmatprep.subr.mxu0 0.0
    %278 = vmatpush2.msra.mxu0 0.0
    %279 = vmatprep.subr.mxu0 0.0
    %280 = vmatpush2.msra.mxu0 0.0
    %281 = vmatprep.subr.mxu0 0.0
    %282 = vmatpush2.msra.mxu0 0.0
    %283 = vmatprep.subr.mxu0 0.0
    %284 = vmatpush2.msra.mxu0 0.0
    %285 = vmatprep.subr.mxu0 0.0
    %286 = vmatpush2.msra.mxu0 0.0
    %287 = vmatprep.subr.mxu0 0.0
    %288 = vmatpush2.msra.mxu0 0.0
    %289 = vmatprep.subr.mxu0 0.0
    %290 = vmatpush2.msra.mxu0 0.0
    %291 = vmatprep.subr.mxu0 0.0
    %292 = vmatpush2.msra.mxu0 0.0
    %293 = vmatprep.mubr.f32.mxu0 0.0
    %294 = vmatmul.mubr.f32.gmra.mxu0 %v134
    %v295 = vpop.f32.mrf.mxu0
    %v296 = vadd.f32 %v131, %v295
    %v297 = vpop.f32.mrf.mxu0
    %298 = vmatprep.mubr.f32.mxu0 0.0
    %299 = vmatmul.mubr.f32.gmra.mxu0 %v137
    %v300 = vpop.f32.mrf.mxu0
    %v301 = vadd.f32 %v131, %v300
    %v302 = vpop.f32.mrf.mxu0
    %303 = vmatprep.mubr.f32.mxu0 0.0
    %304 = vmatmul.mubr.f32.gmra.mxu0 %v140
    %v305 = vpop.f32.mrf.mxu0
    %v306 = vadd.f32 %v131, %v305
    %v307 = vpop.f32.mrf.mxu0
    %308 = vmatprep.mubr.f32.mxu0 0.0
    %309 = vmatmul.mubr.f32.gmra.mxu0 %v143
    %v310 = vpop.f32.mrf.mxu0
    %v311 = vadd.f32 %v131, %v310
    %v312 = vpop.f32.mrf.mxu0
    %313 = vmatprep.mubr.f32.mxu0 0.0
    %314 = vmatmul.mubr.f32.gmra.mxu0 %v146
    %v315 = vpop.f32.mrf.mxu0
    %v316 = vadd.f32 %v131, %v315
    %v317 = vpop.f32.mrf.mxu0
    %318 = vmatprep.mubr.f32.mxu0 0.0
    %319 = vmatmul.mubr.f32.gmra.mxu0 %v149
    %v320 = vpop.f32.mrf.mxu0
    %v321 = vadd.f32 %v131, %v320
    %v322 = vpop.f32.mrf.mxu0
    %323 = vmatprep.mubr.f32.mxu0 0.0
    %324 = vmatmul.mubr.f32.gmra.mxu0 %v152
    %v325 = vpop.f32.mrf.mxu0
    %v326 = vadd.f32 %v131, %v325
    %v327 = vpop.f32.mrf.mxu0
    %328 = vmatprep.mubr.f32.mxu0 0.0
    %329 = vmatmul.mubr.f32.gmra.mxu0 %v155
    %v330 = vpop.f32.mrf.mxu0
    %v331 = vadd.f32 %v131, %v330
    %v332 = vpop.f32.mrf.mxu0
    %333 = vmatprep.mubr.f32.mxu0 0.0
    %334 = vmatmul.mubr.f32.gmra.mxu0 %v158
    %v335 = vpop.f32.mrf.mxu0
    %v336 = vadd.f32 %v131, %v335
    %v337 = vpop.f32.mrf.mxu0
    %338 = vmatprep.mubr.f32.mxu0 0.0
    %339 = vmatmul.mubr.f32.gmra.mxu0 %v161
    %v340 = vpop.f32.mrf.mxu0
    %v341 = vadd.f32 %v131, %v340
    %v342 = vpop.f32.mrf.mxu0
    %343 = vmatprep.mubr.f32.mxu0 0.0
    %344 = vmatmul.mubr.f32.gmra.mxu0 %v164
    %v345 = vpop.f32.mrf.mxu0
    %v346 = vadd.f32 %v131, %v345
    %v347 = vpop.f32.mrf.mxu0
    %348 = vmatprep.mubr.f32.mxu0 0.0
    %349 = vmatmul.mubr.f32.gmra.mxu0 %v167
    %v350 = vpop.f32.mrf.mxu0
    %v351 = vadd.f32 %v131, %v350
    %v352 = vpop.f32.mrf.mxu0
    %353 = vmatprep.mubr.f32.mxu0 0.0
    %354 = vmatmul.mubr.f32.gmra.mxu0 %v170
    %v355 = vpop.f32.mrf.mxu0
    %v356 = vadd.f32 %v131, %v355
    %v357 = vpop.f32.mrf.mxu0
    %358 = vmatprep.mubr.f32.mxu0 0.0
    %359 = vmatmul.mubr.f32.gmra.mxu0 %v173
    %v360 = vpop.f32.mrf.mxu0
    %v361 = vadd.f32 %v131, %v360
    %v362 = vpop.f32.mrf.mxu0
    %363 = vmatprep.mubr.f32.mxu0 0.0
    %364 = vmatmul.mubr.f32.gmra.mxu0 %v176
    %v365 = vpop.f32.mrf.mxu0
    %v366 = vadd.f32 %v131, %v365
    %v367 = vpop.f32.mrf.mxu0
    %368 = vmatprep.mubr.f32.mxu0 0.0
    %369 = vmatmul.mubr.f32.gmra.mxu0 %v179
    %v370 = vpop.f32.mrf.mxu0
    %v371 = vadd.f32 %v131, %v370
    %v372 = vpop.f32.mrf.mxu0
    %373 = vmatprep.mubr.f32.mxu0 0.0
    %374 = vmatmul.mubr.f32.gmra.mxu0 %v182
    %v375 = vpop.f32.mrf.mxu0
    %v376 = vadd.f32 %v131, %v375
    %v377 = vpop.f32.mrf.mxu0
    %378 = vmatprep.mubr.f32.mxu0 0.0
    %379 = vmatmul.mubr.f32.gmra.mxu0 %v185
    %v380 = vpop.f32.mrf.mxu0
    %v381 = vadd.f32 %v131, %v380
    %v382 = vpop.f32.mrf.mxu0
    %383 = vmatprep.mubr.f32.mxu0 0.0
    %384 = vmatmul.mubr.f32.gmra.mxu0 %v188
    %v385 = vpop.f32.mrf.mxu0
    %v386 = vadd.f32 %v131, %v385
    %v387 = vpop.f32.mrf.mxu0
    %388 = vmatprep.mubr.f32.mxu0 0.0
    %389 = vmatmul.mubr.f32.gmra.mxu0 %v191
    %v390 = vpop.f32.mrf.mxu0
    %v391 = vadd.f32 %v131, %v390
    %v392 = vpop.f32.mrf.mxu0
    %393 = vmatprep.mubr.f32.mxu0 0.0
    %394 = vmatmul.mubr.f32.gmra.mxu0 %v194
    %v395 = vpop.f32.mrf.mxu0
    %v396 = vadd.f32 %v131, %v395
    %v397 = vpop.f32.mrf.mxu0
    %398 = vmatprep.mubr.f32.mxu0 0.0
    %399 = vmatmul.mubr.f32.gmra.mxu0 %v197
    %v400 = vpop.f32.mrf.mxu0
    %v401 = vadd.f32 %v131, %v400
    %v402 = vpop.f32.mrf.mxu0
    %403 = vmatprep.mubr.f32.mxu0 0.0
    %404 = vmatmul.mubr.f32.gmra.mxu0 %v200
    %v405 = vpop.f32.mrf.mxu0
    %v406 = vadd.f32 %v131, %v405
    %v407 = vpop.f32.mrf.mxu0
    %408 = vmatprep.mubr.f32.mxu0 0.0
    %409 = vmatmul.mubr.f32.gmra.mxu0 %v203
    %v410 = vpop.f32.mrf.mxu0
    %v411 = vadd.f32 %v131, %v410
    %v412 = vpop.f32.mrf.mxu0
    %413 = vmatprep.mubr.f32.mxu0 0.0
    %414 = vmatmul.mubr.f32.gmra.mxu0 %v206
    %v415 = vpop.f32.mrf.mxu0
    %v416 = vadd.f32 %v131, %v415
    %v417 = vpop.f32.mrf.mxu0
    %418 = vmatprep.mubr.f32.mxu0 0.0
    %419 = vmatmul.mubr.f32.gmra.mxu0 %v209
    %v420 = vpop.f32.mrf.mxu0
    %v421 = vadd.f32 %v131, %v420
    %v422 = vpop.f32.mrf.mxu0
    %423 = vmatprep.mubr.f32.mxu0 0.0
    %424 = vmatmul.mubr.f32.gmra.mxu0 %v212
    %v425 = vpop.f32.mrf.mxu0
    %v426 = vadd.f32 %v131, %v425
    %v427 = vpop.f32.mrf.mxu0
    %428 = vmatprep.mubr.f32.mxu0 0.0
    %429 = vmatmul.mubr.f32.gmra.mxu0 %v215
    %v430 = vpop.f32.mrf.mxu0
    %v431 = vadd.f32 %v131, %v430
    %v432 = vpop.f32.mrf.mxu0
    %433 = vmatprep.mubr.f32.mxu0 0.0
    %434 = vmatmul.mubr.f32.gmra.mxu0 %v218
    %v435 = vpop.f32.mrf.mxu0
    %v436 = vadd.f32 %v131, %v435
    %v437 = vpop.f32.mrf.mxu0
    %438 = vmatprep.mubr.f32.mxu0 0.0
    %439 = vmatmul.mubr.f32.gmra.mxu0 %v221
    %v440 = vpop.f32.mrf.mxu0
    %v441 = vadd.f32 %v131, %v440
    %v442 = vpop.f32.mrf.mxu0
    %443 = vmatprep.mubr.f32.mxu0 0.0
    %444 = vmatmul.mubr.f32.gmra.mxu0 %v224
    %v445 = vpop.f32.mrf.mxu0
    %v446 = vadd.f32 %v131, %v445
    %v447 = vpop.f32.mrf.mxu0
    %448 = vmatprep.mubr.f32.mxu0 0.0
    %449 = vmatmul.mubr.f32.gmra.mxu0 %v227
    %v450 = vpop.f32.mrf.mxu0
    %v451 = vadd.f32 %v131, %v450
    %v452 = vpop.f32.mrf.mxu0
    %453 = vdwg.mxu0
    %v454 = vmax.f32 %v296, 0.0
    %v455 = vmax.f32 %v301, 0.0
    %v456 = vmax.f32 %v306, 0.0
    %v457 = vmax.f32 %v311, 0.0
    %v458 = vmax.f32 %v316, 0.0
    %v459 = vmax.f32 %v321, 0.0
    %v460 = vmax.f32 %v326, 0.0
    %v461 = vmax.f32 %v331, 0.0
    %v462 = vmax.f32 %v336, 0.0
    %v463 = vmax.f32 %v341, 0.0
    %v464 = vmax.f32 %v346, 0.0
    %v465 = vmax.f32 %v351, 0.0
    %v466 = vmax.f32 %v356, 0.0
    %v467 = vmax.f32 %v361, 0.0
    %v468 = vmax.f32 %v366, 0.0
    %v469 = vmax.f32 %v371, 0.0
    %v470 = vmax.f32 %v376, 0.0
    %v471 = vmax.f32 %v381, 0.0
    %v472 = vmax.f32 %v386, 0.0
    %v473 = vmax.f32 %v391, 0.0
    %v474 = vmax.f32 %v396, 0.0
    %v475 = vmax.f32 %v401, 0.0
    %v476 = vmax.f32 %v406, 0.0
    %v477 = vmax.f32 %v411, 0.0
    %v478 = vmax.f32 %v416, 0.0
    %v479 = vmax.f32 %v421, 0.0
    %v480 = vmax.f32 %v426, 0.0
    %v481 = vmax.f32 %v431, 0.0
    %v482 = vmax.f32 %v436, 0.0
    %v483 = vmax.f32 %v441, 0.0
    %v484 = vmax.f32 %v446, 0.0
    %v485 = vmax.f32 %v451, 0.0
    %v486 = vlaneseq
    %v487 = vshrl.u32 %v486, 7
    %v488 = vsub.s32 0, %v487
    %v489 = vrot.slane %v125, %v488
    %490 = vmatprep.subr.mxu0 0.0
    %491 = vmatpush1.msra.mxu0 %v105
    %492 = vmatprep.subr.mxu0 0.0
    %493 = vmatpush1.msra.mxu0 %v104
    %494 = vmatprep.subr.mxu0 0.0
    %495 = vmatpush1.msra.mxu0 %v103
    %496 = vmatprep.subr.mxu0 0.0
    %497 = vmatpush1.msra.mxu0 %v102
    %498 = vmatprep.subr.mxu0 0.0
    %499 = vmatpush1.msra.mxu0 %v101
    %500 = vmatprep.subr.mxu0 0.0
    %501 = vmatpush1.msra.mxu0 %v100
    %502 = vmatprep.subr.mxu0 0.0
    %503 = vmatpush1.msra.mxu0 %v99
    %504 = vmatprep.subr.mxu0 0.0
    %505 = vmatpush1.msra.mxu0 %v98
    %506 = vmatprep.subr.mxu0 0.0
    %507 = vmatpush1.msra.mxu0 %v97
    %508 = vmatprep.subr.mxu0 0.0
    %509 = vmatpush1.msra.mxu0 %v96
    %510 = vmatprep.subr.mxu0 0.0
    %511 = vmatpush1.msra.mxu0 %v95
    %512 = vmatprep.subr.mxu0 0.0
    %513 = vmatpush1.msra.mxu0 %v94
    %514 = vmatprep.subr.mxu0 0.0
    %515 = vmatpush1.msra.mxu0 %v93
    %516 = vmatprep.subr.mxu0 0.0
    %517 = vmatpush1.msra.mxu0 %v92
    %518 = vmatprep.subr.mxu0 0.0
    %519 = vmatpush1.msra.mxu0 %v91
    %520 = vmatprep.subr.mxu0 0.0
    %521 = vmatpush1.msra.mxu0 %v90
    %522 = vmatprep.subr.mxu0 0.0
    %523 = vmatpush2.msra.mxu0 0.0
    %524 = vmatprep.subr.mxu0 0.0
    %525 = vmatpush2.msra.mxu0 0.0
    %526 = vmatprep.subr.mxu0 0.0
    %527 = vmatpush2.msra.mxu0 0.0
    %528 = vmatprep.subr.mxu0 0.0
    %529 = vmatpush2.msra.mxu0 0.0
    %530 = vmatprep.subr.mxu0 0.0
    %531 = vmatpush2.msra.mxu0 0.0
    %532 = vmatprep.subr.mxu0 0.0
    %533 = vmatpush2.msra.mxu0 0.0
    %534 = vmatprep.subr.mxu0 0.0
    %535 = vmatpush2.msra.mxu0 0.0
    %536 = vmatprep.subr.mxu0 0.0
    %537 = vmatpush2.msra.mxu0 0.0
    %538 = vmatprep.subr.mxu0 0.0
    %539 = vmatpush2.msra.mxu0 0.0
    %540 = vmatprep.subr.mxu0 0.0
    %541 = vmatpush2.msra.mxu0 0.0
    %542 = vmatprep.subr.mxu0 0.0
    %543 = vmatpush2.msra.mxu0 0.0
    %544 = vmatprep.subr.mxu0 0.0
    %545 = vmatpush2.msra.mxu0 0.0
    %546 = vmatprep.subr.mxu0 0.0
    %547 = vmatpush2.msra.mxu0 0.0
    %548 = vmatprep.subr.mxu0 0.0
    %549 = vmatpush2.msra.mxu0 0.0
    %550 = vmatprep.subr.mxu0 0.0
    %551 = vmatpush2.msra.mxu0 0.0
    %552 = vmatprep.subr.mxu0 0.0
    %553 = vmatpush2.msra.mxu0 0.0
    %554 = vmatprep.mubr.f32.mxu0 0.0
    %555 = vmatmul.mubr.f32.gmra.mxu0 %v454
    %v556 = vpop.f32.mrf.mxu0
    %v557 = vadd.f32 %v489, %v556
    %v558 = vpop.f32.mrf.mxu0
    %559 = vmatprep.mubr.f32.mxu0 0.0
    %560 = vmatmul.mubr.f32.gmra.mxu0 %v455
    %v561 = vpop.f32.mrf.mxu0
    %v562 = vadd.f32 %v489, %v561
    %v563 = vpop.f32.mrf.mxu0
    %564 = vmatprep.mubr.f32.mxu0 0.0
    %565 = vmatmul.mubr.f32.gmra.mxu0 %v456
    %v566 = vpop.f32.mrf.mxu0
    %v567 = vadd.f32 %v489, %v566
    %v568 = vpop.f32.mrf.mxu0
    %569 = vmatprep.mubr.f32.mxu0 0.0
    %570 = vmatmul.mubr.f32.gmra.mxu0 %v457
    %v571 = vpop.f32.mrf.mxu0
    %v572 = vadd.f32 %v489, %v571
    %v573 = vpop.f32.mrf.mxu0
    %574 = vmatprep.mubr.f32.mxu0 0.0
    %575 = vmatmul.mubr.f32.gmra.mxu0 %v458
    %v576 = vpop.f32.mrf.mxu0
    %v577 = vadd.f32 %v489, %v576
    %v578 = vpop.f32.mrf.mxu0
    %579 = vmatprep.mubr.f32.mxu0 0.0
    %580 = vmatmul.mubr.f32.gmra.mxu0 %v459
    %v581 = vpop.f32.mrf.mxu0
    %v582 = vadd.f32 %v489, %v581
    %v583 = vpop.f32.mrf.mxu0
    %584 = vmatprep.mubr.f32.mxu0 0.0
    %585 = vmatmul.mubr.f32.gmra.mxu0 %v460
    %v586 = vpop.f32.mrf.mxu0
    %v587 = vadd.f32 %v489, %v586
    %v588 = vpop.f32.mrf.mxu0
    %589 = vmatprep.mubr.f32.mxu0 0.0
    %590 = vmatmul.mubr.f32.gmra.mxu0 %v461
    %v591 = vpop.f32.mrf.mxu0
    %v592 = vadd.f32 %v489, %v591
    %v593 = vpop.f32.mrf.mxu0
    %594 = vmatprep.mubr.f32.mxu0 0.0
    %595 = vmatmul.mubr.f32.gmra.mxu0 %v462
    %v596 = vpop.f32.mrf.mxu0
    %v597 = vadd.f32 %v489, %v596
    %v598 = vpop.f32.mrf.mxu0
    %599 = vmatprep.mubr.f32.mxu0 0.0
    %600 = vmatmul.mubr.f32.gmra.mxu0 %v463
    %v601 = vpop.f32.mrf.mxu0
    %v602 = vadd.f32 %v489, %v601
    %v603 = vpop.f32.mrf.mxu0
    %604 = vmatprep.mubr.f32.mxu0 0.0
    %605 = vmatmul.mubr.f32.gmra.mxu0 %v464
    %v606 = vpop.f32.mrf.mxu0
    %v607 = vadd.f32 %v489, %v606
    %v608 = vpop.f32.mrf.mxu0
    %609 = vmatprep.mubr.f32.mxu0 0.0
    %610 = vmatmul.mubr.f32.gmra.mxu0 %v465
    %v611 = vpop.f32.mrf.mxu0
    %v612 = vadd.f32 %v489, %v611
    %v613 = vpop.f32.mrf.mxu0
    %614 = vmatprep.mubr.f32.mxu0 0.0
    %615 = vmatmul.mubr.f32.gmra.mxu0 %v466
    %v616 = vpop.f32.mrf.mxu0
    %v617 = vadd.f32 %v489, %v616
    %v618 = vpop.f32.mrf.mxu0
    %619 = vmatprep.mubr.f32.mxu0 0.0
    %620 = vmatmul.mubr.f32.gmra.mxu0 %v467
    %v621 = vpop.f32.mrf.mxu0
    %v622 = vadd.f32 %v489, %v621
    %v623 = vpop.f32.mrf.mxu0
    %624 = vmatprep.mubr.f32.mxu0 0.0
    %625 = vmatmul.mubr.f32.gmra.mxu0 %v468
    %v626 = vpop.f32.mrf.mxu0
    %v627 = vadd.f32 %v489, %v626
    %v628 = vpop.f32.mrf.mxu0
    %629 = vmatprep.mubr.f32.mxu0 0.0
    %630 = vmatmul.mubr.f32.gmra.mxu0 %v469
    %v631 = vpop.f32.mrf.mxu0
    %v632 = vadd.f32 %v489, %v631
    %v633 = vpop.f32.mrf.mxu0
    %634 = vmatprep.mubr.f32.mxu0 0.0
    %635 = vmatmul.mubr.f32.gmra.mxu0 %v470
    %v636 = vpop.f32.mrf.mxu0
    %v637 = vadd.f32 %v489, %v636
    %v638 = vpop.f32.mrf.mxu0
    %639 = vmatprep.mubr.f32.mxu0 0.0
    %640 = vmatmul.mubr.f32.gmra.mxu0 %v471
    %v641 = vpop.f32.mrf.mxu0
    %v642 = vadd.f32 %v489, %v641
    %v643 = vpop.f32.mrf.mxu0
    %644 = vmatprep.mubr.f32.mxu0 0.0
    %645 = vmatmul.mubr.f32.gmra.mxu0 %v472
    %v646 = vpop.f32.mrf.mxu0
    %v647 = vadd.f32 %v489, %v646
    %v648 = vpop.f32.mrf.mxu0
    %649 = vmatprep.mubr.f32.mxu0 0.0
    %650 = vmatmul.mubr.f32.gmra.mxu0 %v473
    %v651 = vpop.f32.mrf.mxu0
    %v652 = vadd.f32 %v489, %v651
    %v653 = vpop.f32.mrf.mxu0
    %654 = vmatprep.mubr.f32.mxu0 0.0
    %655 = vmatmul.mubr.f32.gmra.mxu0 %v474
    %v656 = vpop.f32.mrf.mxu0
    %v657 = vadd.f32 %v489, %v656
    %v658 = vpop.f32.mrf.mxu0
    %659 = vmatprep.mubr.f32.mxu0 0.0
    %660 = vmatmul.mubr.f32.gmra.mxu0 %v475
    %v661 = vpop.f32.mrf.mxu0
    %v662 = vadd.f32 %v489, %v661
    %v663 = vpop.f32.mrf.mxu0
    %664 = vmatprep.mubr.f32.mxu0 0.0
    %665 = vmatmul.mubr.f32.gmra.mxu0 %v476
    %v666 = vpop.f32.mrf.mxu0
    %v667 = vadd.f32 %v489, %v666
    %v668 = vpop.f32.mrf.mxu0
    %669 = vmatprep.mubr.f32.mxu0 0.0
    %670 = vmatmul.mubr.f32.gmra.mxu0 %v477
    %v671 = vpop.f32.mrf.mxu0
    %v672 = vadd.f32 %v489, %v671
    %v673 = vpop.f32.mrf.mxu0
    %674 = vmatprep.mubr.f32.mxu0 0.0
    %675 = vmatmul.mubr.f32.gmra.mxu0 %v478
    %v676 = vpop.f32.mrf.mxu0
    %v677 = vadd.f32 %v489, %v676
    %v678 = vpop.f32.mrf.mxu0
    %679 = vmatprep.mubr.f32.mxu0 0.0
    %680 = vmatmul.mubr.f32.gmra.mxu0 %v479
    %v681 = vpop.f32.mrf.mxu0
    %v682 = vadd.f32 %v489, %v681
    %v683 = vpop.f32.mrf.mxu0
    %684 = vmatprep.mubr.f32.mxu0 0.0
    %685 = vmatmul.mubr.f32.gmra.mxu0 %v480
    %v686 = vpop.f32.mrf.mxu0
    %v687 = vadd.f32 %v489, %v686
    %v688 = vpop.f32.mrf.mxu0
    %689 = vmatprep.mubr.f32.mxu0 0.0
    %690 = vmatmul.mubr.f32.gmra.mxu0 %v481
    %v691 = vpop.f32.mrf.mxu0
    %v692 = vadd.f32 %v489, %v691
    %v693 = vpop.f32.mrf.mxu0
    %694 = vmatprep.mubr.f32.mxu0 0.0
    %695 = vmatmul.mubr.f32.gmra.mxu0 %v482
    %v696 = vpop.f32.mrf.mxu0
    %v697 = vadd.f32 %v489, %v696
    %v698 = vpop.f32.mrf.mxu0
    %699 = vmatprep.mubr.f32.mxu0 0.0
    %700 = vmatmul.mubr.f32.gmra.mxu0 %v483
    %v701 = vpop.f32.mrf.mxu0
    %v702 = vadd.f32 %v489, %v701
    %v703 = vpop.f32.mrf.mxu0
    %704 = vmatprep.mubr.f32.mxu0 0.0
    %705 = vmatmul.mubr.f32.gmra.mxu0 %v484
    %v706 = vpop.f32.mrf.mxu0
    %v707 = vadd.f32 %v489, %v706
    %v708 = vpop.f32.mrf.mxu0
    %709 = vmatprep.mubr.f32.mxu0 0.0
    %710 = vmatmul.mubr.f32.gmra.mxu0 %v485
    %v711 = vpop.f32.mrf.mxu0
    %v712 = vadd.f32 %v489, %v711
    %v713 = vpop.f32.mrf.mxu0
    %714 = vdwg.mxu0
    %v715 = vmul.f32 %v557, 0.5
    %v716 = vmul.f32 %v562, 0.5
    %v717 = vmul.f32 %v567, 0.5
    %v718 = vmul.f32 %v572, 0.5
    %v719 = vmul.f32 %v577, 0.5
    %v720 = vmul.f32 %v582, 0.5
    %v721 = vmul.f32 %v587, 0.5
    %v722 = vmul.f32 %v592, 0.5
    %v723 = vmul.f32 %v597, 0.5
    %v724 = vmul.f32 %v602, 0.5
    %v725 = vmul.f32 %v607, 0.5
    %v726 = vmul.f32 %v612, 0.5
    %v727 = vmul.f32 %v617, 0.5
    %v728 = vmul.f32 %v622, 0.5
    %v729 = vmul.f32 %v627, 0.5
    %v730 = vmul.f32 %v632, 0.5
    %v731 = vmul.f32 %v637, 0.5
    %v732 = vmul.f32 %v642, 0.5
    %v733 = vmul.f32 %v647, 0.5
    %v734 = vmul.f32 %v652, 0.5
    %v735 = vmul.f32 %v657, 0.5
    %v736 = vmul.f32 %v662, 0.5
    %v737 = vmul.f32 %v667, 0.5
    %v738 = vmul.f32 %v672, 0.5
    %v739 = vmul.f32 %v677, 0.5
    %v740 = vmul.f32 %v682, 0.5
    %v741 = vmul.f32 %v687, 0.5
    %v742 = vmul.f32 %v692, 0.5
    %v743 = vmul.f32 %v697, 0.5
    %v744 = vmul.f32 %v702, 0.5
    %v745 = vmul.f32 %v707, 0.5
    %v746 = vmul.f32 %v712, 0.5
    %v747 = vmul.f32 %v715, 1.442695
    %v748 = vpow.pop %v747
    %v749 = vmul.f32 %v716, 1.442695
    %v750 = vpow.pop %v749
    %v751 = vmul.f32 %v717, 1.442695
    %v752 = vpow.pop %v751
    %v753 = vmul.f32 %v718, 1.442695
    %v754 = vpow.pop %v753
    %v755 = vmul.f32 %v719, 1.442695
    %v756 = vpow.pop %v755
    %v757 = vmul.f32 %v720, 1.442695
    %v758 = vpow.pop %v757
    %v759 = vmul.f32 %v721, 1.442695
    %v760 = vpow.pop %v759
    %v761 = vmul.f32 %v722, 1.442695
    %v762 = vpow.pop %v761
    %v763 = vmul.f32 %v723, 1.442695
    %v764 = vpow.pop %v763
    %v765 = vmul.f32 %v724, 1.442695
    %v766 = vpow.pop %v765
    %v767 = vmul.f32 %v725, 1.442695
    %v768 = vpow.pop %v767
    %v769 = vmul.f32 %v726, 1.442695
    %v770 = vpow.pop %v769
    %v771 = vmul.f32 %v727, 1.442695
    %v772 = vpow.pop %v771
    %v773 = vmul.f32 %v728, 1.442695
    %v774 = vpow.pop %v773
    %v775 = vmul.f32 %v729, 1.442695
    %v776 = vpow.pop %v775
    %v777 = vmul.f32 %v730, 1.442695
    %v778 = vpow.pop %v777
    %v779 = vmul.f32 %v731, 1.442695
    %v780 = vpow.pop %v779
    %v781 = vmul.f32 %v732, 1.442695
    %v782 = vpow.pop %v781
    %v783 = vmul.f32 %v733, 1.442695
    %v784 = vpow.pop %v783
    %v785 = vmul.f32 %v734, 1.442695
    %v786 = vpow.pop %v785
    %v787 = vmul.f32 %v735, 1.442695
    %v788 = vpow.pop %v787
    %v789 = vmul.f32 %v736, 1.442695
    %v790 = vpow.pop %v789
    %v791 = vmul.f32 %v737, 1.442695
    %v792 = vpow.pop %v791
    %v793 = vmul.f32 %v738, 1.442695
    %v794 = vpow.pop %v793
    %v795 = vmul.f32 %v739, 1.442695
    %v796 = vpow.pop %v795
    %v797 = vmul.f32 %v740, 1.442695
    %v798 = vpow.pop %v797
    %v799 = vmul.f32 %v741, 1.442695
    %v800 = vpow.pop %v799
    %v801 = vmul.f32 %v742, 1.442695
    %v802 = vpow.pop %v801
    %v803 = vmul.f32 %v743, 1.442695
    %v804 = vpow.pop %v803
    %v805 = vmul.f32 %v744, 1.442695
    %v806 = vpow.pop %v805
    %v807 = vmul.f32 %v745, 1.442695
    %v808 = vpow.pop %v807
    %v809 = vmul.f32 %v746, 1.442695
    %v810 = vpow.pop %v809
    %843 = vrot.lane.b32.xlu0 %v50, 16
    %v844 = vpop.permute.xlu0 %843
    %845 = vrot.lane.b32.xlu0 %v51, 16
    %v846 = vpop.permute.xlu0 %845
    %847 = vrot.lane.b32.xlu0 %v52, 16
    %v848 = vpop.permute.xlu0 %847
    %849 = vrot.lane.b32.xlu0 %v53, 16
    %v850 = vpop.permute.xlu0 %849
    %851 = vrot.lane.b32.xlu0 %v54, 16
    %v852 = vpop.permute.xlu0 %851
    %853 = vrot.lane.b32.xlu0 %v55, 16
    %v854 = vpop.permute.xlu0 %853
    %855 = vrot.lane.b32.xlu0 %v56, 16
    %v856 = vpop.permute.xlu0 %855
    %857 = vrot.lane.b32.xlu0 %v57, 16
    %v858 = vpop.permute.xlu0 %857
    %859 = vrot.lane.b32.xlu0 %v58, 16
    %v860 = vpop.permute.xlu0 %859
    %861 = vrot.lane.b32.xlu0 %v59, 16
    %v862 = vpop.permute.xlu0 %861
    %863 = vrot.lane.b32.xlu0 %v60, 16
    %v864 = vpop.permute.xlu0 %863
    %865 = vrot.lane.b32.xlu0 %v61, 16
    %v866 = vpop.permute.xlu0 %865
    %867 = vrot.lane.b32.xlu0 %v62, 16
    %v868 = vpop.permute.xlu0 %867
    %869 = vrot.lane.b32.xlu0 %v63, 16
    %v870 = vpop.permute.xlu0 %869
    %871 = vrot.lane.b32.xlu0 %v64, 16
    %v872 = vpop.permute.xlu0 %871
    %873 = vrot.lane.b32.xlu0 %v65, 16
    %v874 = vpop.permute.xlu0 %873
    %875 = vrot.lane.b32.xlu0 %v66, 16
    %v876 = vpop.permute.xlu0 %875
    %877 = vrot.lane.b32.xlu0 %v67, 16
    %v878 = vpop.permute.xlu0 %877
    %879 = vrot.lane.b32.xlu0 %v68, 16
    %v880 = vpop.permute.xlu0 %879
    %881 = vrot.lane.b32.xlu0 %v69, 16
    %v882 = vpop.permute.xlu0 %881
    %883 = vrot.lane.b32.xlu0 %v70, 16
    %v884 = vpop.permute.xlu0 %883
    %885 = vrot.lane.b32.xlu0 %v71, 16
    %v886 = vpop.permute.xlu0 %885
    %887 = vrot.lane.b32.xlu0 %v72, 16
    %v888 = vpop.permute.xlu0 %887
    %889 = vrot.lane.b32.xlu0 %v73, 16
    %v890 = vpop.permute.xlu0 %889
    %891 = vrot.lane.b32.xlu0 %v74, 16
    %v892 = vpop.permute.xlu0 %891
    %893 = vrot.lane.b32.xlu0 %v75, 16
    %v894 = vpop.permute.xlu0 %893
    %895 = vrot.lane.b32.xlu0 %v76, 16
    %v896 = vpop.permute.xlu0 %895
    %897 = vrot.lane.b32.xlu0 %v77, 16
    %v898 = vpop.permute.xlu0 %897
    %899 = vrot.lane.b32.xlu0 %v78, 16
    %v900 = vpop.permute.xlu0 %899
    %901 = vrot.lane.b32.xlu0 %v79, 16
    %v902 = vpop.permute.xlu0 %901
    %903 = vrot.lane.b32.xlu0 %v80, 16
    %v904 = vpop.permute.xlu0 %903
    %905 = vrot.lane.b32.xlu0 %v81, 16
    %v906 = vpop.permute.xlu0 %905
    %v939 = vmul.f32 %v748, %v844
    %v940 = vmul.f32 %v750, %v846
    %v941 = vmul.f32 %v752, %v848
    %v942 = vmul.f32 %v754, %v850
    %v943 = vmul.f32 %v756, %v852
    %v944 = vmul.f32 %v758, %v854
    %v945 = vmul.f32 %v760, %v856
    %v946 = vmul.f32 %v762, %v858
    %v947 = vmul.f32 %v764, %v860
    %v948 = vmul.f32 %v766, %v862
    %v949 = vmul.f32 %v768, %v864
    %v950 = vmul.f32 %v770, %v866
    %v951 = vmul.f32 %v772, %v868
    %v952 = vmul.f32 %v774, %v870
    %v953 = vmul.f32 %v776, %v872
    %v954 = vmul.f32 %v778, %v874
    %v955 = vmul.f32 %v780, %v876
    %v956 = vmul.f32 %v782, %v878
    %v957 = vmul.f32 %v784, %v880
    %v958 = vmul.f32 %v786, %v882
    %v959 = vmul.f32 %v788, %v884
    %v960 = vmul.f32 %v790, %v886
    %v961 = vmul.f32 %v792, %v888
    %v962 = vmul.f32 %v794, %v890
    %v963 = vmul.f32 %v796, %v892
    %v964 = vmul.f32 %v798, %v894
    %v965 = vmul.f32 %v800, %v896
    %v966 = vmul.f32 %v802, %v898
    %v967 = vmul.f32 %v804, %v900
    %v968 = vmul.f32 %v806, %v902
    %v969 = vmul.f32 %v808, %v904
    %v970 = vmul.f32 %v810, %v906
    %1003 = vrot.lane.b32.xlu0 %v939, 112
    %v1004 = vpop.permute.xlu0 %1003
    %1005 = vrot.lane.b32.xlu0 %v940, 112
    %v1006 = vpop.permute.xlu0 %1005
    %1007 = vrot.lane.b32.xlu0 %v941, 112
    %v1008 = vpop.permute.xlu0 %1007
    %1009 = vrot.lane.b32.xlu0 %v942, 112
    %v1010 = vpop.permute.xlu0 %1009
    %1011 = vrot.lane.b32.xlu0 %v943, 112
    %v1012 = vpop.permute.xlu0 %1011
    %1013 = vrot.lane.b32.xlu0 %v944, 112
    %v1014 = vpop.permute.xlu0 %1013
    %1015 = vrot.lane.b32.xlu0 %v945, 112
    %v1016 = vpop.permute.xlu0 %1015
    %1017 = vrot.lane.b32.xlu0 %v946, 112
    %v1018 = vpop.permute.xlu0 %1017
    %1019 = vrot.lane.b32.xlu0 %v947, 112
    %v1020 = vpop.permute.xlu0 %1019
    %1021 = vrot.lane.b32.xlu0 %v948, 112
    %v1022 = vpop.permute.xlu0 %1021
    %1023 = vrot.lane.b32.xlu0 %v949, 112
    %v1024 = vpop.permute.xlu0 %1023
    %1025 = vrot.lane.b32.xlu0 %v950, 112
    %v1026 = vpop.permute.xlu0 %1025
    %1027 = vrot.lane.b32.xlu0 %v951, 112
    %v1028 = vpop.permute.xlu0 %1027
    %1029 = vrot.lane.b32.xlu0 %v952, 112
    %v1030 = vpop.permute.xlu0 %1029
    %1031 = vrot.lane.b32.xlu0 %v953, 112
    %v1032 = vpop.permute.xlu0 %1031
    %1033 = vrot.lane.b32.xlu0 %v954, 112
    %v1034 = vpop.permute.xlu0 %1033
    %1035 = vrot.lane.b32.xlu0 %v955, 112
    %v1036 = vpop.permute.xlu0 %1035
    %1037 = vrot.lane.b32.xlu0 %v956, 112
    %v1038 = vpop.permute.xlu0 %1037
    %1039 = vrot.lane.b32.xlu0 %v957, 112
    %v1040 = vpop.permute.xlu0 %1039
    %1041 = vrot.lane.b32.xlu0 %v958, 112
    %v1042 = vpop.permute.xlu0 %1041
    %1043 = vrot.lane.b32.xlu0 %v959, 112
    %v1044 = vpop.permute.xlu0 %1043
    %1045 = vrot.lane.b32.xlu0 %v960, 112
    %v1046 = vpop.permute.xlu0 %1045
    %1047 = vrot.lane.b32.xlu0 %v961, 112
    %v1048 = vpop.permute.xlu0 %1047
    %1049 = vrot.lane.b32.xlu0 %v962, 112
    %v1050 = vpop.permute.xlu0 %1049
    %1051 = vrot.lane.b32.xlu0 %v963, 112
    %v1052 = vpop.permute.xlu0 %1051
    %1053 = vrot.lane.b32.xlu0 %v964, 112
    %v1054 = vpop.permute.xlu0 %1053
    %1055 = vrot.lane.b32.xlu0 %v965, 112
    %v1056 = vpop.permute.xlu0 %1055
    %1057 = vrot.lane.b32.xlu0 %v966, 112
    %v1058 = vpop.permute.xlu0 %1057
    %1059 = vrot.lane.b32.xlu0 %v967, 112
    %v1060 = vpop.permute.xlu0 %1059
    %1061 = vrot.lane.b32.xlu0 %v968, 112
    %v1062 = vpop.permute.xlu0 %1061
    %1063 = vrot.lane.b32.xlu0 %v969, 112
    %v1064 = vpop.permute.xlu0 %1063
    %1065 = vrot.lane.b32.xlu0 %v970, 112
    %v1066 = vpop.permute.xlu0 %1065
    %v1099 = vadd.f32 %v557, %v1004
    %v1100 = vadd.f32 %v562, %v1006
    %v1101 = vadd.f32 %v567, %v1008
    %v1102 = vadd.f32 %v572, %v1010
    %v1103 = vadd.f32 %v577, %v1012
    %v1104 = vadd.f32 %v582, %v1014
    %v1105 = vadd.f32 %v587, %v1016
    %v1106 = vadd.f32 %v592, %v1018
    %v1107 = vadd.f32 %v597, %v1020
    %v1108 = vadd.f32 %v602, %v1022
    %v1109 = vadd.f32 %v607, %v1024
    %v1110 = vadd.f32 %v612, %v1026
    %v1111 = vadd.f32 %v617, %v1028
    %v1112 = vadd.f32 %v622, %v1030
    %v1113 = vadd.f32 %v627, %v1032
    %v1114 = vadd.f32 %v632, %v1034
    %v1115 = vadd.f32 %v637, %v1036
    %v1116 = vadd.f32 %v642, %v1038
    %v1117 = vadd.f32 %v647, %v1040
    %v1118 = vadd.f32 %v652, %v1042
    %v1119 = vadd.f32 %v657, %v1044
    %v1120 = vadd.f32 %v662, %v1046
    %v1121 = vadd.f32 %v667, %v1048
    %v1122 = vadd.f32 %v672, %v1050
    %v1123 = vadd.f32 %v677, %v1052
    %v1124 = vadd.f32 %v682, %v1054
    %v1125 = vadd.f32 %v687, %v1056
    %v1126 = vadd.f32 %v692, %v1058
    %v1127 = vadd.f32 %v697, %v1060
    %v1128 = vadd.f32 %v702, %v1062
    %v1129 = vadd.f32 %v707, %v1064
    %v1130 = vadd.f32 %v712, %v1066
    %v1131 = vlaneseq
    %v1132 = vshrl.u32 %v1131, 7
    %v1133 = vsub.s32 0, %v1132
    %v1134 = vrot.slane %v126, %v1133
    %vm1135 = vcmask 130048
    %v1137 = vsel %vm1135, %v1099, 0
    %v1140 = vsel %vm1135, %v1100, 0
    %v1143 = vsel %vm1135, %v1101, 0
    %v1146 = vsel %vm1135, %v1102, 0
    %v1149 = vsel %vm1135, %v1103, 0
    %v1152 = vsel %vm1135, %v1104, 0
    %v1155 = vsel %vm1135, %v1105, 0
    %v1158 = vsel %vm1135, %v1106, 0
    %v1161 = vsel %vm1135, %v1107, 0
    %v1164 = vsel %vm1135, %v1108, 0
    %v1167 = vsel %vm1135, %v1109, 0
    %v1170 = vsel %vm1135, %v1110, 0
    %v1173 = vsel %vm1135, %v1111, 0
    %v1176 = vsel %vm1135, %v1112, 0
    %v1179 = vsel %vm1135, %v1113, 0
    %v1182 = vsel %vm1135, %v1114, 0
    %v1185 = vsel %vm1135, %v1115, 0
    %v1188 = vsel %vm1135, %v1116, 0
    %v1191 = vsel %vm1135, %v1117, 0
    %v1194 = vsel %vm1135, %v1118, 0
    %v1197 = vsel %vm1135, %v1119, 0
    %v1200 = vsel %vm1135, %v1120, 0
    %v1203 = vsel %vm1135, %v1121, 0
    %v1206 = vsel %vm1135, %v1122, 0
    %v1209 = vsel %vm1135, %v1123, 0
    %v1212 = vsel %vm1135, %v1124, 0
    %v1215 = vsel %vm1135, %v1125, 0
    %v1218 = vsel %vm1135, %v1126, 0
    %v1221 = vsel %vm1135, %v1127, 0
    %v1224 = vsel %vm1135, %v1128, 0
    %v1227 = vsel %vm1135, %v1129, 0
    %v1230 = vsel %vm1135, %v1130, 0
    %1232 = vmatprep.subr.mxu0 0.0
    %1233 = vmatpush1.msra.mxu0 0.0
    %1234 = vmatprep.subr.mxu0 0.0
    %1235 = vmatpush1.msra.mxu0 0.0
    %1236 = vmatprep.subr.mxu0 0.0
    %1237 = vmatpush1.msra.mxu0 0.0
    %1238 = vmatprep.subr.mxu0 0.0
    %1239 = vmatpush1.msra.mxu0 0.0
    %1240 = vmatprep.subr.mxu0 0.0
    %1241 = vmatpush1.msra.mxu0 0.0
    %1242 = vmatprep.subr.mxu0 0.0
    %1243 = vmatpush1.msra.mxu0 0.0
    %1244 = vmatprep.subr.mxu0 0.0
    %1245 = vmatpush1.msra.mxu0 0.0
    %1246 = vmatprep.subr.mxu0 0.0
    %1247 = vmatpush1.msra.mxu0 0.0
    %1248 = vmatprep.subr.mxu0 0.0
    %1249 = vmatpush1.msra.mxu0 0.0
    %1250 = vmatprep.subr.mxu0 0.0
    %1251 = vmatpush1.msra.mxu0 0.0
    %1252 = vmatprep.subr.mxu0 0.0
    %1253 = vmatpush1.msra.mxu0 0.0
    %1254 = vmatprep.subr.mxu0 0.0
    %1255 = vmatpush1.msra.mxu0 0.0
    %1256 = vmatprep.subr.mxu0 0.0
    %1257 = vmatpush1.msra.mxu0 0.0
    %1258 = vmatprep.subr.mxu0 0.0
    %1259 = vmatpush1.msra.mxu0 0.0
    %1260 = vmatprep.subr.mxu0 0.0
    %1261 = vmatpush1.msra.mxu0 %v107
    %1262 = vmatprep.subr.mxu0 0.0
    %1263 = vmatpush1.msra.mxu0 %v106
    %1264 = vmatprep.subr.mxu0 0.0
    %1265 = vmatpush2.msra.mxu0 0.0
    %1266 = vmatprep.subr.mxu0 0.0
    %1267 = vmatpush2.msra.mxu0 0.0
    %1268 = vmatprep.subr.mxu0 0.0
    %1269 = vmatpush2.msra.mxu0 0.0
    %1270 = vmatprep.subr.mxu0 0.0
    %1271 = vmatpush2.msra.mxu0 0.0
    %1272 = vmatprep.subr.mxu0 0.0
    %1273 = vmatpush2.msra.mxu0 0.0
    %1274 = vmatprep.subr.mxu0 0.0
    %1275 = vmatpush2.msra.mxu0 0.0
    %1276 = vmatprep.subr.mxu0 0.0
    %1277 = vmatpush2.msra.mxu0 0.0
    %1278 = vmatprep.subr.mxu0 0.0
    %1279 = vmatpush2.msra.mxu0 0.0
    %1280 = vmatprep.subr.mxu0 0.0
    %1281 = vmatpush2.msra.mxu0 0.0
    %1282 = vmatprep.subr.mxu0 0.0
    %1283 = vmatpush2.msra.mxu0 0.0
    %1284 = vmatprep.subr.mxu0 0.0
    %1285 = vmatpush2.msra.mxu0 0.0
    %1286 = vmatprep.subr.mxu0 0.0
    %1287 = vmatpush2.msra.mxu0 0.0
    %1288 = vmatprep.subr.mxu0 0.0
    %1289 = vmatpush2.msra.mxu0 0.0
    %1290 = vmatprep.subr.mxu0 0.0
    %1291 = vmatpush2.msra.mxu0 0.0
    %1292 = vmatprep.subr.mxu0 0.0
    %1293 = vmatpush2.msra.mxu0 0.0
    %1294 = vmatprep.subr.mxu0 0.0
    %1295 = vmatpush2.msra.mxu0 0.0
    %1296 = vmatprep.mubr.f32.mxu0 0.0
    %1297 = vmatmul.mubr.f32.gmra.mxu0 %v1137
    %v1298 = vpop.f32.mrf.mxu0
    %v1299 = vadd.f32 %v1134, %v1298
    %v1300 = vpop.f32.mrf.mxu0
    %1301 = vmatprep.mubr.f32.mxu0 0.0
    %1302 = vmatmul.mubr.f32.gmra.mxu0 %v1140
    %v1303 = vpop.f32.mrf.mxu0
    %v1304 = vadd.f32 %v1134, %v1303
    %v1305 = vpop.f32.mrf.mxu0
    %1306 = vmatprep.mubr.f32.mxu0 0.0
    %1307 = vmatmul.mubr.f32.gmra.mxu0 %v1143
    %v1308 = vpop.f32.mrf.mxu0
    %v1309 = vadd.f32 %v1134, %v1308
    %v1310 = vpop.f32.mrf.mxu0
    %1311 = vmatprep.mubr.f32.mxu0 0.0
    %1312 = vmatmul.mubr.f32.gmra.mxu0 %v1146
    %v1313 = vpop.f32.mrf.mxu0
    %v1314 = vadd.f32 %v1134, %v1313
    %v1315 = vpop.f32.mrf.mxu0
    %1316 = vmatprep.mubr.f32.mxu0 0.0
    %1317 = vmatmul.mubr.f32.gmra.mxu0 %v1149
    %v1318 = vpop.f32.mrf.mxu0
    %v1319 = vadd.f32 %v1134, %v1318
    %v1320 = vpop.f32.mrf.mxu0
    %1321 = vmatprep.mubr.f32.mxu0 0.0
    %1322 = vmatmul.mubr.f32.gmra.mxu0 %v1152
    %v1323 = vpop.f32.mrf.mxu0
    %v1324 = vadd.f32 %v1134, %v1323
    %v1325 = vpop.f32.mrf.mxu0
    %1326 = vmatprep.mubr.f32.mxu0 0.0
    %1327 = vmatmul.mubr.f32.gmra.mxu0 %v1155
    %v1328 = vpop.f32.mrf.mxu0
    %v1329 = vadd.f32 %v1134, %v1328
    %v1330 = vpop.f32.mrf.mxu0
    %1331 = vmatprep.mubr.f32.mxu0 0.0
    %1332 = vmatmul.mubr.f32.gmra.mxu0 %v1158
    %v1333 = vpop.f32.mrf.mxu0
    %v1334 = vadd.f32 %v1134, %v1333
    %v1335 = vpop.f32.mrf.mxu0
    %1336 = vmatprep.mubr.f32.mxu0 0.0
    %1337 = vmatmul.mubr.f32.gmra.mxu0 %v1161
    %v1338 = vpop.f32.mrf.mxu0
    %v1339 = vadd.f32 %v1134, %v1338
    %v1340 = vpop.f32.mrf.mxu0
    %1341 = vmatprep.mubr.f32.mxu0 0.0
    %1342 = vmatmul.mubr.f32.gmra.mxu0 %v1164
    %v1343 = vpop.f32.mrf.mxu0
    %v1344 = vadd.f32 %v1134, %v1343
    %v1345 = vpop.f32.mrf.mxu0
    %1346 = vmatprep.mubr.f32.mxu0 0.0
    %1347 = vmatmul.mubr.f32.gmra.mxu0 %v1167
    %v1348 = vpop.f32.mrf.mxu0
    %v1349 = vadd.f32 %v1134, %v1348
    %v1350 = vpop.f32.mrf.mxu0
    %1351 = vmatprep.mubr.f32.mxu0 0.0
    %1352 = vmatmul.mubr.f32.gmra.mxu0 %v1170
    %v1353 = vpop.f32.mrf.mxu0
    %v1354 = vadd.f32 %v1134, %v1353
    %v1355 = vpop.f32.mrf.mxu0
    %1356 = vmatprep.mubr.f32.mxu0 0.0
    %1357 = vmatmul.mubr.f32.gmra.mxu0 %v1173
    %v1358 = vpop.f32.mrf.mxu0
    %v1359 = vadd.f32 %v1134, %v1358
    %v1360 = vpop.f32.mrf.mxu0
    %1361 = vmatprep.mubr.f32.mxu0 0.0
    %1362 = vmatmul.mubr.f32.gmra.mxu0 %v1176
    %v1363 = vpop.f32.mrf.mxu0
    %v1364 = vadd.f32 %v1134, %v1363
    %v1365 = vpop.f32.mrf.mxu0
    %1366 = vmatprep.mubr.f32.mxu0 0.0
    %1367 = vmatmul.mubr.f32.gmra.mxu0 %v1179
    %v1368 = vpop.f32.mrf.mxu0
    %v1369 = vadd.f32 %v1134, %v1368
    %v1370 = vpop.f32.mrf.mxu0
    %1371 = vmatprep.mubr.f32.mxu0 0.0
    %1372 = vmatmul.mubr.f32.gmra.mxu0 %v1182
    %v1373 = vpop.f32.mrf.mxu0
    %v1374 = vadd.f32 %v1134, %v1373
    %v1375 = vpop.f32.mrf.mxu0
    %1376 = vmatprep.mubr.f32.mxu0 0.0
    %1377 = vmatmul.mubr.f32.gmra.mxu0 %v1185
    %v1378 = vpop.f32.mrf.mxu0
    %v1379 = vadd.f32 %v1134, %v1378
    %v1380 = vpop.f32.mrf.mxu0
    %1381 = vmatprep.mubr.f32.mxu0 0.0
    %1382 = vmatmul.mubr.f32.gmra.mxu0 %v1188
    %v1383 = vpop.f32.mrf.mxu0
    %v1384 = vadd.f32 %v1134, %v1383
    %v1385 = vpop.f32.mrf.mxu0
    %1386 = vmatprep.mubr.f32.mxu0 0.0
    %1387 = vmatmul.mubr.f32.gmra.mxu0 %v1191
    %v1388 = vpop.f32.mrf.mxu0
    %v1389 = vadd.f32 %v1134, %v1388
    %v1390 = vpop.f32.mrf.mxu0
    %1391 = vmatprep.mubr.f32.mxu0 0.0
    %1392 = vmatmul.mubr.f32.gmra.mxu0 %v1194
    %v1393 = vpop.f32.mrf.mxu0
    %v1394 = vadd.f32 %v1134, %v1393
    %v1395 = vpop.f32.mrf.mxu0
    %1396 = vmatprep.mubr.f32.mxu0 0.0
    %1397 = vmatmul.mubr.f32.gmra.mxu0 %v1197
    %v1398 = vpop.f32.mrf.mxu0
    %v1399 = vadd.f32 %v1134, %v1398
    %v1400 = vpop.f32.mrf.mxu0
    %1401 = vmatprep.mubr.f32.mxu0 0.0
    %1402 = vmatmul.mubr.f32.gmra.mxu0 %v1200
    %v1403 = vpop.f32.mrf.mxu0
    %v1404 = vadd.f32 %v1134, %v1403
    %v1405 = vpop.f32.mrf.mxu0
    %1406 = vmatprep.mubr.f32.mxu0 0.0
    %1407 = vmatmul.mubr.f32.gmra.mxu0 %v1203
    %v1408 = vpop.f32.mrf.mxu0
    %v1409 = vadd.f32 %v1134, %v1408
    %v1410 = vpop.f32.mrf.mxu0
    %1411 = vmatprep.mubr.f32.mxu0 0.0
    %1412 = vmatmul.mubr.f32.gmra.mxu0 %v1206
    %v1413 = vpop.f32.mrf.mxu0
    %v1414 = vadd.f32 %v1134, %v1413
    %v1415 = vpop.f32.mrf.mxu0
    %1416 = vmatprep.mubr.f32.mxu0 0.0
    %1417 = vmatmul.mubr.f32.gmra.mxu0 %v1209
    %v1418 = vpop.f32.mrf.mxu0
    %v1419 = vadd.f32 %v1134, %v1418
    %v1420 = vpop.f32.mrf.mxu0
    %1421 = vmatprep.mubr.f32.mxu0 0.0
    %1422 = vmatmul.mubr.f32.gmra.mxu0 %v1212
    %v1423 = vpop.f32.mrf.mxu0
    %v1424 = vadd.f32 %v1134, %v1423
    %v1425 = vpop.f32.mrf.mxu0
    %1426 = vmatprep.mubr.f32.mxu0 0.0
    %1427 = vmatmul.mubr.f32.gmra.mxu0 %v1215
    %v1428 = vpop.f32.mrf.mxu0
    %v1429 = vadd.f32 %v1134, %v1428
    %v1430 = vpop.f32.mrf.mxu0
    %1431 = vmatprep.mubr.f32.mxu0 0.0
    %1432 = vmatmul.mubr.f32.gmra.mxu0 %v1218
    %v1433 = vpop.f32.mrf.mxu0
    %v1434 = vadd.f32 %v1134, %v1433
    %v1435 = vpop.f32.mrf.mxu0
    %1436 = vmatprep.mubr.f32.mxu0 0.0
    %1437 = vmatmul.mubr.f32.gmra.mxu0 %v1221
    %v1438 = vpop.f32.mrf.mxu0
    %v1439 = vadd.f32 %v1134, %v1438
    %v1440 = vpop.f32.mrf.mxu0
    %1441 = vmatprep.mubr.f32.mxu0 0.0
    %1442 = vmatmul.mubr.f32.gmra.mxu0 %v1224
    %v1443 = vpop.f32.mrf.mxu0
    %v1444 = vadd.f32 %v1134, %v1443
    %v1445 = vpop.f32.mrf.mxu0
    %1446 = vmatprep.mubr.f32.mxu0 0.0
    %1447 = vmatmul.mubr.f32.gmra.mxu0 %v1227
    %v1448 = vpop.f32.mrf.mxu0
    %v1449 = vadd.f32 %v1134, %v1448
    %v1450 = vpop.f32.mrf.mxu0
    %1451 = vmatprep.mubr.f32.mxu0 0.0
    %1452 = vmatmul.mubr.f32.gmra.mxu0 %v1230
    %v1453 = vpop.f32.mrf.mxu0
    %v1454 = vadd.f32 %v1134, %v1453
    %v1455 = vpop.f32.mrf.mxu0
    %1456 = vdwg.mxu0
    %v1457 = vmax.f32 %v1299, 0.0
    %v1458 = vmax.f32 %v1304, 0.0
    %v1459 = vmax.f32 %v1309, 0.0
    %v1460 = vmax.f32 %v1314, 0.0
    %v1461 = vmax.f32 %v1319, 0.0
    %v1462 = vmax.f32 %v1324, 0.0
    %v1463 = vmax.f32 %v1329, 0.0
    %v1464 = vmax.f32 %v1334, 0.0
    %v1465 = vmax.f32 %v1339, 0.0
    %v1466 = vmax.f32 %v1344, 0.0
    %v1467 = vmax.f32 %v1349, 0.0
    %v1468 = vmax.f32 %v1354, 0.0
    %v1469 = vmax.f32 %v1359, 0.0
    %v1470 = vmax.f32 %v1364, 0.0
    %v1471 = vmax.f32 %v1369, 0.0
    %v1472 = vmax.f32 %v1374, 0.0
    %v1473 = vmax.f32 %v1379, 0.0
    %v1474 = vmax.f32 %v1384, 0.0
    %v1475 = vmax.f32 %v1389, 0.0
    %v1476 = vmax.f32 %v1394, 0.0
    %v1477 = vmax.f32 %v1399, 0.0
    %v1478 = vmax.f32 %v1404, 0.0
    %v1479 = vmax.f32 %v1409, 0.0
    %v1480 = vmax.f32 %v1414, 0.0
    %v1481 = vmax.f32 %v1419, 0.0
    %v1482 = vmax.f32 %v1424, 0.0
    %v1483 = vmax.f32 %v1429, 0.0
    %v1484 = vmax.f32 %v1434, 0.0
    %v1485 = vmax.f32 %v1439, 0.0
    %v1486 = vmax.f32 %v1444, 0.0
    %v1487 = vmax.f32 %v1449, 0.0
    %v1488 = vmax.f32 %v1454, 0.0
    %v1489 = vlaneseq
    %v1490 = vshrl.u32 %v1489, 7
    %v1491 = vsub.s32 0, %v1490
    %v1492 = vrot.slane %v127, %v1491
    %1493 = vmatprep.subr.mxu0 0.0
    %1494 = vmatpush1.msra.mxu0 %v123
    %1495 = vmatprep.subr.mxu0 0.0
    %1496 = vmatpush1.msra.mxu0 %v122
    %1497 = vmatprep.subr.mxu0 0.0
    %1498 = vmatpush1.msra.mxu0 %v121
    %1499 = vmatprep.subr.mxu0 0.0
    %1500 = vmatpush1.msra.mxu0 %v120
    %1501 = vmatprep.subr.mxu0 0.0
    %1502 = vmatpush1.msra.mxu0 %v119
    %1503 = vmatprep.subr.mxu0 0.0
    %1504 = vmatpush1.msra.mxu0 %v118
    %1505 = vmatprep.subr.mxu0 0.0
    %1506 = vmatpush1.msra.mxu0 %v117
    %1507 = vmatprep.subr.mxu0 0.0
    %1508 = vmatpush1.msra.mxu0 %v116
    %1509 = vmatprep.subr.mxu0 0.0
    %1510 = vmatpush1.msra.mxu0 %v115
    %1511 = vmatprep.subr.mxu0 0.0
    %1512 = vmatpush1.msra.mxu0 %v114
    %1513 = vmatprep.subr.mxu0 0.0
    %1514 = vmatpush1.msra.mxu0 %v113
    %1515 = vmatprep.subr.mxu0 0.0
    %1516 = vmatpush1.msra.mxu0 %v112
    %1517 = vmatprep.subr.mxu0 0.0
    %1518 = vmatpush1.msra.mxu0 %v111
    %1519 = vmatprep.subr.mxu0 0.0
    %1520 = vmatpush1.msra.mxu0 %v110
    %1521 = vmatprep.subr.mxu0 0.0
    %1522 = vmatpush1.msra.mxu0 %v109
    %1523 = vmatprep.subr.mxu0 0.0
    %1524 = vmatpush1.msra.mxu0 %v108
    %1525 = vmatprep.subr.mxu0 0.0
    %1526 = vmatpush2.msra.mxu0 0.0
    %1527 = vmatprep.subr.mxu0 0.0
    %1528 = vmatpush2.msra.mxu0 0.0
    %1529 = vmatprep.subr.mxu0 0.0
    %1530 = vmatpush2.msra.mxu0 0.0
    %1531 = vmatprep.subr.mxu0 0.0
    %1532 = vmatpush2.msra.mxu0 0.0
    %1533 = vmatprep.subr.mxu0 0.0
    %1534 = vmatpush2.msra.mxu0 0.0
    %1535 = vmatprep.subr.mxu0 0.0
    %1536 = vmatpush2.msra.mxu0 0.0
    %1537 = vmatprep.subr.mxu0 0.0
    %1538 = vmatpush2.msra.mxu0 0.0
    %1539 = vmatprep.subr.mxu0 0.0
    %1540 = vmatpush2.msra.mxu0 0.0
    %1541 = vmatprep.subr.mxu0 0.0
    %1542 = vmatpush2.msra.mxu0 0.0
    %1543 = vmatprep.subr.mxu0 0.0
    %1544 = vmatpush2.msra.mxu0 0.0
    %1545 = vmatprep.subr.mxu0 0.0
    %1546 = vmatpush2.msra.mxu0 0.0
    %1547 = vmatprep.subr.mxu0 0.0
    %1548 = vmatpush2.msra.mxu0 0.0
    %1549 = vmatprep.subr.mxu0 0.0
    %1550 = vmatpush2.msra.mxu0 0.0
    %1551 = vmatprep.subr.mxu0 0.0
    %1552 = vmatpush2.msra.mxu0 0.0
    %1553 = vmatprep.subr.mxu0 0.0
    %1554 = vmatpush2.msra.mxu0 0.0
    %1555 = vmatprep.subr.mxu0 0.0
    %1556 = vmatpush2.msra.mxu0 0.0
    %1557 = vmatprep.mubr.f32.mxu0 0.0
    %1558 = vmatmul.mubr.f32.gmra.mxu0 %v1457
    %v1559 = vpop.f32.mrf.mxu0
    %v1560 = vadd.f32 %v1492, %v1559
    %v1561 = vpop.f32.mrf.mxu0
    %1562 = vmatprep.mubr.f32.mxu0 0.0
    %1563 = vmatmul.mubr.f32.gmra.mxu0 %v1458
    %v1564 = vpop.f32.mrf.mxu0
    %v1565 = vadd.f32 %v1492, %v1564
    %v1566 = vpop.f32.mrf.mxu0
    %1567 = vmatprep.mubr.f32.mxu0 0.0
    %1568 = vmatmul.mubr.f32.gmra.mxu0 %v1459
    %v1569 = vpop.f32.mrf.mxu0
    %v1570 = vadd.f32 %v1492, %v1569
    %v1571 = vpop.f32.mrf.mxu0
    %1572 = vmatprep.mubr.f32.mxu0 0.0
    %1573 = vmatmul.mubr.f32.gmra.mxu0 %v1460
    %v1574 = vpop.f32.mrf.mxu0
    %v1575 = vadd.f32 %v1492, %v1574
    %v1576 = vpop.f32.mrf.mxu0
    %1577 = vmatprep.mubr.f32.mxu0 0.0
    %1578 = vmatmul.mubr.f32.gmra.mxu0 %v1461
    %v1579 = vpop.f32.mrf.mxu0
    %v1580 = vadd.f32 %v1492, %v1579
    %v1581 = vpop.f32.mrf.mxu0
    %1582 = vmatprep.mubr.f32.mxu0 0.0
    %1583 = vmatmul.mubr.f32.gmra.mxu0 %v1462
    %v1584 = vpop.f32.mrf.mxu0
    %v1585 = vadd.f32 %v1492, %v1584
    %v1586 = vpop.f32.mrf.mxu0
    %1587 = vmatprep.mubr.f32.mxu0 0.0
    %1588 = vmatmul.mubr.f32.gmra.mxu0 %v1463
    %v1589 = vpop.f32.mrf.mxu0
    %v1590 = vadd.f32 %v1492, %v1589
    %v1591 = vpop.f32.mrf.mxu0
    %1592 = vmatprep.mubr.f32.mxu0 0.0
    %1593 = vmatmul.mubr.f32.gmra.mxu0 %v1464
    %v1594 = vpop.f32.mrf.mxu0
    %v1595 = vadd.f32 %v1492, %v1594
    %v1596 = vpop.f32.mrf.mxu0
    %1597 = vmatprep.mubr.f32.mxu0 0.0
    %1598 = vmatmul.mubr.f32.gmra.mxu0 %v1465
    %v1599 = vpop.f32.mrf.mxu0
    %v1600 = vadd.f32 %v1492, %v1599
    %v1601 = vpop.f32.mrf.mxu0
    %1602 = vmatprep.mubr.f32.mxu0 0.0
    %1603 = vmatmul.mubr.f32.gmra.mxu0 %v1466
    %v1604 = vpop.f32.mrf.mxu0
    %v1605 = vadd.f32 %v1492, %v1604
    %v1606 = vpop.f32.mrf.mxu0
    %1607 = vmatprep.mubr.f32.mxu0 0.0
    %1608 = vmatmul.mubr.f32.gmra.mxu0 %v1467
    %v1609 = vpop.f32.mrf.mxu0
    %v1610 = vadd.f32 %v1492, %v1609
    %v1611 = vpop.f32.mrf.mxu0
    %1612 = vmatprep.mubr.f32.mxu0 0.0
    %1613 = vmatmul.mubr.f32.gmra.mxu0 %v1468
    %v1614 = vpop.f32.mrf.mxu0
    %v1615 = vadd.f32 %v1492, %v1614
    %v1616 = vpop.f32.mrf.mxu0
    %1617 = vmatprep.mubr.f32.mxu0 0.0
    %1618 = vmatmul.mubr.f32.gmra.mxu0 %v1469
    %v1619 = vpop.f32.mrf.mxu0
    %v1620 = vadd.f32 %v1492, %v1619
    %v1621 = vpop.f32.mrf.mxu0
    %1622 = vmatprep.mubr.f32.mxu0 0.0
    %1623 = vmatmul.mubr.f32.gmra.mxu0 %v1470
    %v1624 = vpop.f32.mrf.mxu0
    %v1625 = vadd.f32 %v1492, %v1624
    %v1626 = vpop.f32.mrf.mxu0
    %1627 = vmatprep.mubr.f32.mxu0 0.0
    %1628 = vmatmul.mubr.f32.gmra.mxu0 %v1471
    %v1629 = vpop.f32.mrf.mxu0
    %v1630 = vadd.f32 %v1492, %v1629
    %v1631 = vpop.f32.mrf.mxu0
    %1632 = vmatprep.mubr.f32.mxu0 0.0
    %1633 = vmatmul.mubr.f32.gmra.mxu0 %v1472
    %v1634 = vpop.f32.mrf.mxu0
    %v1635 = vadd.f32 %v1492, %v1634
    %v1636 = vpop.f32.mrf.mxu0
    %1637 = vmatprep.mubr.f32.mxu0 0.0
    %1638 = vmatmul.mubr.f32.gmra.mxu0 %v1473
    %v1639 = vpop.f32.mrf.mxu0
    %v1640 = vadd.f32 %v1492, %v1639
    %v1641 = vpop.f32.mrf.mxu0
    %1642 = vmatprep.mubr.f32.mxu0 0.0
    %1643 = vmatmul.mubr.f32.gmra.mxu0 %v1474
    %v1644 = vpop.f32.mrf.mxu0
    %v1645 = vadd.f32 %v1492, %v1644
    %v1646 = vpop.f32.mrf.mxu0
    %1647 = vmatprep.mubr.f32.mxu0 0.0
    %1648 = vmatmul.mubr.f32.gmra.mxu0 %v1475
    %v1649 = vpop.f32.mrf.mxu0
    %v1650 = vadd.f32 %v1492, %v1649
    %v1651 = vpop.f32.mrf.mxu0
    %1652 = vmatprep.mubr.f32.mxu0 0.0
    %1653 = vmatmul.mubr.f32.gmra.mxu0 %v1476
    %v1654 = vpop.f32.mrf.mxu0
    %v1655 = vadd.f32 %v1492, %v1654
    %v1656 = vpop.f32.mrf.mxu0
    %1657 = vmatprep.mubr.f32.mxu0 0.0
    %1658 = vmatmul.mubr.f32.gmra.mxu0 %v1477
    %v1659 = vpop.f32.mrf.mxu0
    %v1660 = vadd.f32 %v1492, %v1659
    %v1661 = vpop.f32.mrf.mxu0
    %1662 = vmatprep.mubr.f32.mxu0 0.0
    %1663 = vmatmul.mubr.f32.gmra.mxu0 %v1478
    %v1664 = vpop.f32.mrf.mxu0
    %v1665 = vadd.f32 %v1492, %v1664
    %v1666 = vpop.f32.mrf.mxu0
    %1667 = vmatprep.mubr.f32.mxu0 0.0
    %1668 = vmatmul.mubr.f32.gmra.mxu0 %v1479
    %v1669 = vpop.f32.mrf.mxu0
    %v1670 = vadd.f32 %v1492, %v1669
    %v1671 = vpop.f32.mrf.mxu0
    %1672 = vmatprep.mubr.f32.mxu0 0.0
    %1673 = vmatmul.mubr.f32.gmra.mxu0 %v1480
    %v1674 = vpop.f32.mrf.mxu0
    %v1675 = vadd.f32 %v1492, %v1674
    %v1676 = vpop.f32.mrf.mxu0
    %1677 = vmatprep.mubr.f32.mxu0 0.0
    %1678 = vmatmul.mubr.f32.gmra.mxu0 %v1481
    %v1679 = vpop.f32.mrf.mxu0
    %v1680 = vadd.f32 %v1492, %v1679
    %v1681 = vpop.f32.mrf.mxu0
    %1682 = vmatprep.mubr.f32.mxu0 0.0
    %1683 = vmatmul.mubr.f32.gmra.mxu0 %v1482
    %v1684 = vpop.f32.mrf.mxu0
    %v1685 = vadd.f32 %v1492, %v1684
    %v1686 = vpop.f32.mrf.mxu0
    %1687 = vmatprep.mubr.f32.mxu0 0.0
    %1688 = vmatmul.mubr.f32.gmra.mxu0 %v1483
    %v1689 = vpop.f32.mrf.mxu0
    %v1690 = vadd.f32 %v1492, %v1689
    %v1691 = vpop.f32.mrf.mxu0
    %1692 = vmatprep.mubr.f32.mxu0 0.0
    %1693 = vmatmul.mubr.f32.gmra.mxu0 %v1484
    %v1694 = vpop.f32.mrf.mxu0
    %v1695 = vadd.f32 %v1492, %v1694
    %v1696 = vpop.f32.mrf.mxu0
    %1697 = vmatprep.mubr.f32.mxu0 0.0
    %1698 = vmatmul.mubr.f32.gmra.mxu0 %v1485
    %v1699 = vpop.f32.mrf.mxu0
    %v1700 = vadd.f32 %v1492, %v1699
    %v1701 = vpop.f32.mrf.mxu0
    %1702 = vmatprep.mubr.f32.mxu0 0.0
    %1703 = vmatmul.mubr.f32.gmra.mxu0 %v1486
    %v1704 = vpop.f32.mrf.mxu0
    %v1705 = vadd.f32 %v1492, %v1704
    %v1706 = vpop.f32.mrf.mxu0
    %1707 = vmatprep.mubr.f32.mxu0 0.0
    %1708 = vmatmul.mubr.f32.gmra.mxu0 %v1487
    %v1709 = vpop.f32.mrf.mxu0
    %v1710 = vadd.f32 %v1492, %v1709
    %v1711 = vpop.f32.mrf.mxu0
    %1712 = vmatprep.mubr.f32.mxu0 0.0
    %1713 = vmatmul.mubr.f32.gmra.mxu0 %v1488
    %v1714 = vpop.f32.mrf.mxu0
    %v1715 = vadd.f32 %v1492, %v1714
    %v1716 = vpop.f32.mrf.mxu0
    %1717 = vdwg.mxu0
    %v1718 = vxor.u32 %v1560, 2147483648
    %v1719 = vxor.u32 %v1565, 2147483648
    %v1720 = vxor.u32 %v1570, 2147483648
    %v1721 = vxor.u32 %v1575, 2147483648
    %v1722 = vxor.u32 %v1580, 2147483648
    %v1723 = vxor.u32 %v1585, 2147483648
    %v1724 = vxor.u32 %v1590, 2147483648
    %v1725 = vxor.u32 %v1595, 2147483648
    %v1726 = vxor.u32 %v1600, 2147483648
    %v1727 = vxor.u32 %v1605, 2147483648
    %v1728 = vxor.u32 %v1610, 2147483648
    %v1729 = vxor.u32 %v1615, 2147483648
    %v1730 = vxor.u32 %v1620, 2147483648
    %v1731 = vxor.u32 %v1625, 2147483648
    %v1732 = vxor.u32 %v1630, 2147483648
    %v1733 = vxor.u32 %v1635, 2147483648
    %v1734 = vxor.u32 %v1640, 2147483648
    %v1735 = vxor.u32 %v1645, 2147483648
    %v1736 = vxor.u32 %v1650, 2147483648
    %v1737 = vxor.u32 %v1655, 2147483648
    %v1738 = vxor.u32 %v1660, 2147483648
    %v1739 = vxor.u32 %v1665, 2147483648
    %v1740 = vxor.u32 %v1670, 2147483648
    %v1741 = vxor.u32 %v1675, 2147483648
    %v1742 = vxor.u32 %v1680, 2147483648
    %v1743 = vxor.u32 %v1685, 2147483648
    %v1744 = vxor.u32 %v1690, 2147483648
    %v1745 = vxor.u32 %v1695, 2147483648
    %v1746 = vxor.u32 %v1700, 2147483648
    %v1747 = vxor.u32 %v1705, 2147483648
    %v1748 = vxor.u32 %v1710, 2147483648
    %v1749 = vxor.u32 %v1715, 2147483648
    %v1750 = vmul.f32 %v1718, 1.442695
    %v1751 = vpow.pop %v1750
    %v1752 = vmul.f32 %v1719, 1.442695
    %v1753 = vpow.pop %v1752
    %v1754 = vmul.f32 %v1720, 1.442695
    %v1755 = vpow.pop %v1754
    %v1756 = vmul.f32 %v1721, 1.442695
    %v1757 = vpow.pop %v1756
    %v1758 = vmul.f32 %v1722, 1.442695
    %v1759 = vpow.pop %v1758
    %v1760 = vmul.f32 %v1723, 1.442695
    %v1761 = vpow.pop %v1760
    %v1762 = vmul.f32 %v1724, 1.442695
    %v1763 = vpow.pop %v1762
    %v1764 = vmul.f32 %v1725, 1.442695
    %v1765 = vpow.pop %v1764
    %v1766 = vmul.f32 %v1726, 1.442695
    %v1767 = vpow.pop %v1766
    %v1768 = vmul.f32 %v1727, 1.442695
    %v1769 = vpow.pop %v1768
    %v1770 = vmul.f32 %v1728, 1.442695
    %v1771 = vpow.pop %v1770
    %v1772 = vmul.f32 %v1729, 1.442695
    %v1773 = vpow.pop %v1772
    %v1774 = vmul.f32 %v1730, 1.442695
    %v1775 = vpow.pop %v1774
    %v1776 = vmul.f32 %v1731, 1.442695
    %v1777 = vpow.pop %v1776
    %v1778 = vmul.f32 %v1732, 1.442695
    %v1779 = vpow.pop %v1778
    %v1780 = vmul.f32 %v1733, 1.442695
    %v1781 = vpow.pop %v1780
    %v1782 = vmul.f32 %v1734, 1.442695
    %v1783 = vpow.pop %v1782
    %v1784 = vmul.f32 %v1735, 1.442695
    %v1785 = vpow.pop %v1784
    %v1786 = vmul.f32 %v1736, 1.442695
    %v1787 = vpow.pop %v1786
    %v1788 = vmul.f32 %v1737, 1.442695
    %v1789 = vpow.pop %v1788
    %v1790 = vmul.f32 %v1738, 1.442695
    %v1791 = vpow.pop %v1790
    %v1792 = vmul.f32 %v1739, 1.442695
    %v1793 = vpow.pop %v1792
    %v1794 = vmul.f32 %v1740, 1.442695
    %v1795 = vpow.pop %v1794
    %v1796 = vmul.f32 %v1741, 1.442695
    %v1797 = vpow.pop %v1796
    %v1798 = vmul.f32 %v1742, 1.442695
    %v1799 = vpow.pop %v1798
    %v1800 = vmul.f32 %v1743, 1.442695
    %v1801 = vpow.pop %v1800
    %v1802 = vmul.f32 %v1744, 1.442695
    %v1803 = vpow.pop %v1802
    %v1804 = vmul.f32 %v1745, 1.442695
    %v1805 = vpow.pop %v1804
    %v1806 = vmul.f32 %v1746, 1.442695
    %v1807 = vpow.pop %v1806
    %v1808 = vmul.f32 %v1747, 1.442695
    %v1809 = vpow.pop %v1808
    %v1810 = vmul.f32 %v1748, 1.442695
    %v1811 = vpow.pop %v1810
    %v1812 = vmul.f32 %v1749, 1.442695
    %v1813 = vpow.pop %v1812
    %v1814 = vadd.f32 %v1751, 1.0
    %v1815 = vadd.f32 %v1753, 1.0
    %v1816 = vadd.f32 %v1755, 1.0
    %v1817 = vadd.f32 %v1757, 1.0
    %v1818 = vadd.f32 %v1759, 1.0
    %v1819 = vadd.f32 %v1761, 1.0
    %v1820 = vadd.f32 %v1763, 1.0
    %v1821 = vadd.f32 %v1765, 1.0
    %v1822 = vadd.f32 %v1767, 1.0
    %v1823 = vadd.f32 %v1769, 1.0
    %v1824 = vadd.f32 %v1771, 1.0
    %v1825 = vadd.f32 %v1773, 1.0
    %v1826 = vadd.f32 %v1775, 1.0
    %v1827 = vadd.f32 %v1777, 1.0
    %v1828 = vadd.f32 %v1779, 1.0
    %v1829 = vadd.f32 %v1781, 1.0
    %v1830 = vadd.f32 %v1783, 1.0
    %v1831 = vadd.f32 %v1785, 1.0
    %v1832 = vadd.f32 %v1787, 1.0
    %v1833 = vadd.f32 %v1789, 1.0
    %v1834 = vadd.f32 %v1791, 1.0
    %v1835 = vadd.f32 %v1793, 1.0
    %v1836 = vadd.f32 %v1795, 1.0
    %v1837 = vadd.f32 %v1797, 1.0
    %v1838 = vadd.f32 %v1799, 1.0
    %v1839 = vadd.f32 %v1801, 1.0
    %v1840 = vadd.f32 %v1803, 1.0
    %v1841 = vadd.f32 %v1805, 1.0
    %v1842 = vadd.f32 %v1807, 1.0
    %v1843 = vadd.f32 %v1809, 1.0
    %v1844 = vadd.f32 %v1811, 1.0
    %v1845 = vadd.f32 %v1813, 1.0
    %v1846 = vrcp.pop %v1814
    %v1847 = vmul.f32 1.0, %v1846
    %v1848 = vrcp.pop %v1815
    %v1849 = vmul.f32 1.0, %v1848
    %v1850 = vrcp.pop %v1816
    %v1851 = vmul.f32 1.0, %v1850
    %v1852 = vrcp.pop %v1817
    %v1853 = vmul.f32 1.0, %v1852
    %v1854 = vrcp.pop %v1818
    %v1855 = vmul.f32 1.0, %v1854
    %v1856 = vrcp.pop %v1819
    %v1857 = vmul.f32 1.0, %v1856
    %v1858 = vrcp.pop %v1820
    %v1859 = vmul.f32 1.0, %v1858
    %v1860 = vrcp.pop %v1821
    %v1861 = vmul.f32 1.0, %v1860
    %v1862 = vrcp.pop %v1822
    %v1863 = vmul.f32 1.0, %v1862
    %v1864 = vrcp.pop %v1823
    %v1865 = vmul.f32 1.0, %v1864
    %v1866 = vrcp.pop %v1824
    %v1867 = vmul.f32 1.0, %v1866
    %v1868 = vrcp.pop %v1825
    %v1869 = vmul.f32 1.0, %v1868
    %v1870 = vrcp.pop %v1826
    %v1871 = vmul.f32 1.0, %v1870
    %v1872 = vrcp.pop %v1827
    %v1873 = vmul.f32 1.0, %v1872
    %v1874 = vrcp.pop %v1828
    %v1875 = vmul.f32 1.0, %v1874
    %v1876 = vrcp.pop %v1829
    %v1877 = vmul.f32 1.0, %v1876
    %v1878 = vrcp.pop %v1830
    %v1879 = vmul.f32 1.0, %v1878
    %v1880 = vrcp.pop %v1831
    %v1881 = vmul.f32 1.0, %v1880
    %v1882 = vrcp.pop %v1832
    %v1883 = vmul.f32 1.0, %v1882
    %v1884 = vrcp.pop %v1833
    %v1885 = vmul.f32 1.0, %v1884
    %v1886 = vrcp.pop %v1834
    %v1887 = vmul.f32 1.0, %v1886
    %v1888 = vrcp.pop %v1835
    %v1889 = vmul.f32 1.0, %v1888
    %v1890 = vrcp.pop %v1836
    %v1891 = vmul.f32 1.0, %v1890
    %v1892 = vrcp.pop %v1837
    %v1893 = vmul.f32 1.0, %v1892
    %v1894 = vrcp.pop %v1838
    %v1895 = vmul.f32 1.0, %v1894
    %v1896 = vrcp.pop %v1839
    %v1897 = vmul.f32 1.0, %v1896
    %v1898 = vrcp.pop %v1840
    %v1899 = vmul.f32 1.0, %v1898
    %v1900 = vrcp.pop %v1841
    %v1901 = vmul.f32 1.0, %v1900
    %v1902 = vrcp.pop %v1842
    %v1903 = vmul.f32 1.0, %v1902
    %v1904 = vrcp.pop %v1843
    %v1905 = vmul.f32 1.0, %v1904
    %v1906 = vrcp.pop %v1844
    %v1907 = vmul.f32 1.0, %v1906
    %v1908 = vrcp.pop %v1845
    %v1909 = vmul.f32 1.0, %v1908
    %1942 = vrot.lane.b32.xlu0 %v557, 64
    %v1943 = vpop.permute.xlu0 %1942
    %1944 = vrot.lane.b32.xlu0 %v562, 64
    %v1945 = vpop.permute.xlu0 %1944
    %1946 = vrot.lane.b32.xlu0 %v567, 64
    %v1947 = vpop.permute.xlu0 %1946
    %1948 = vrot.lane.b32.xlu0 %v572, 64
    %v1949 = vpop.permute.xlu0 %1948
    %1950 = vrot.lane.b32.xlu0 %v577, 64
    %v1951 = vpop.permute.xlu0 %1950
    %1952 = vrot.lane.b32.xlu0 %v582, 64
    %v1953 = vpop.permute.xlu0 %1952
    %1954 = vrot.lane.b32.xlu0 %v587, 64
    %v1955 = vpop.permute.xlu0 %1954
    %1956 = vrot.lane.b32.xlu0 %v592, 64
    %v1957 = vpop.permute.xlu0 %1956
    %1958 = vrot.lane.b32.xlu0 %v597, 64
    %v1959 = vpop.permute.xlu0 %1958
    %1960 = vrot.lane.b32.xlu0 %v602, 64
    %v1961 = vpop.permute.xlu0 %1960
    %1962 = vrot.lane.b32.xlu0 %v607, 64
    %v1963 = vpop.permute.xlu0 %1962
    %1964 = vrot.lane.b32.xlu0 %v612, 64
    %v1965 = vpop.permute.xlu0 %1964
    %1966 = vrot.lane.b32.xlu0 %v617, 64
    %v1967 = vpop.permute.xlu0 %1966
    %1968 = vrot.lane.b32.xlu0 %v622, 64
    %v1969 = vpop.permute.xlu0 %1968
    %1970 = vrot.lane.b32.xlu0 %v627, 64
    %v1971 = vpop.permute.xlu0 %1970
    %1972 = vrot.lane.b32.xlu0 %v632, 64
    %v1973 = vpop.permute.xlu0 %1972
    %1974 = vrot.lane.b32.xlu0 %v637, 64
    %v1975 = vpop.permute.xlu0 %1974
    %1976 = vrot.lane.b32.xlu0 %v642, 64
    %v1977 = vpop.permute.xlu0 %1976
    %1978 = vrot.lane.b32.xlu0 %v647, 64
    %v1979 = vpop.permute.xlu0 %1978
    %1980 = vrot.lane.b32.xlu0 %v652, 64
    %v1981 = vpop.permute.xlu0 %1980
    %1982 = vrot.lane.b32.xlu0 %v657, 64
    %v1983 = vpop.permute.xlu0 %1982
    %1984 = vrot.lane.b32.xlu0 %v662, 64
    %v1985 = vpop.permute.xlu0 %1984
    %1986 = vrot.lane.b32.xlu0 %v667, 64
    %v1987 = vpop.permute.xlu0 %1986
    %1988 = vrot.lane.b32.xlu0 %v672, 64
    %v1989 = vpop.permute.xlu0 %1988
    %1990 = vrot.lane.b32.xlu0 %v677, 64
    %v1991 = vpop.permute.xlu0 %1990
    %1992 = vrot.lane.b32.xlu0 %v682, 64
    %v1993 = vpop.permute.xlu0 %1992
    %1994 = vrot.lane.b32.xlu0 %v687, 64
    %v1995 = vpop.permute.xlu0 %1994
    %1996 = vrot.lane.b32.xlu0 %v692, 64
    %v1997 = vpop.permute.xlu0 %1996
    %1998 = vrot.lane.b32.xlu0 %v697, 64
    %v1999 = vpop.permute.xlu0 %1998
    %2000 = vrot.lane.b32.xlu0 %v702, 64
    %v2001 = vpop.permute.xlu0 %2000
    %2002 = vrot.lane.b32.xlu0 %v707, 64
    %v2003 = vpop.permute.xlu0 %2002
    %2004 = vrot.lane.b32.xlu0 %v712, 64
    %v2005 = vpop.permute.xlu0 %2004
    %2038 = vrot.lane.b32.xlu0 %v1099, 96
    %v2039 = vpop.permute.xlu0 %2038
    %2040 = vrot.lane.b32.xlu0 %v1100, 96
    %v2041 = vpop.permute.xlu0 %2040
    %2042 = vrot.lane.b32.xlu0 %v1101, 96
    %v2043 = vpop.permute.xlu0 %2042
    %2044 = vrot.lane.b32.xlu0 %v1102, 96
    %v2045 = vpop.permute.xlu0 %2044
    %2046 = vrot.lane.b32.xlu0 %v1103, 96
    %v2047 = vpop.permute.xlu0 %2046
    %2048 = vrot.lane.b32.xlu0 %v1104, 96
    %v2049 = vpop.permute.xlu0 %2048
    %2050 = vrot.lane.b32.xlu0 %v1105, 96
    %v2051 = vpop.permute.xlu0 %2050
    %2052 = vrot.lane.b32.xlu0 %v1106, 96
    %v2053 = vpop.permute.xlu0 %2052
    %2054 = vrot.lane.b32.xlu0 %v1107, 96
    %v2055 = vpop.permute.xlu0 %2054
    %2056 = vrot.lane.b32.xlu0 %v1108, 96
    %v2057 = vpop.permute.xlu0 %2056
    %2058 = vrot.lane.b32.xlu0 %v1109, 96
    %v2059 = vpop.permute.xlu0 %2058
    %2060 = vrot.lane.b32.xlu0 %v1110, 96
    %v2061 = vpop.permute.xlu0 %2060
    %2062 = vrot.lane.b32.xlu0 %v1111, 96
    %v2063 = vpop.permute.xlu0 %2062
    %2064 = vrot.lane.b32.xlu0 %v1112, 96
    %v2065 = vpop.permute.xlu0 %2064
    %2066 = vrot.lane.b32.xlu0 %v1113, 96
    %v2067 = vpop.permute.xlu0 %2066
    %2068 = vrot.lane.b32.xlu0 %v1114, 96
    %v2069 = vpop.permute.xlu0 %2068
    %2070 = vrot.lane.b32.xlu0 %v1115, 96
    %v2071 = vpop.permute.xlu0 %2070
    %2072 = vrot.lane.b32.xlu0 %v1116, 96
    %v2073 = vpop.permute.xlu0 %2072
    %2074 = vrot.lane.b32.xlu0 %v1117, 96
    %v2075 = vpop.permute.xlu0 %2074
    %2076 = vrot.lane.b32.xlu0 %v1118, 96
    %v2077 = vpop.permute.xlu0 %2076
    %2078 = vrot.lane.b32.xlu0 %v1119, 96
    %v2079 = vpop.permute.xlu0 %2078
    %2080 = vrot.lane.b32.xlu0 %v1120, 96
    %v2081 = vpop.permute.xlu0 %2080
    %2082 = vrot.lane.b32.xlu0 %v1121, 96
    %v2083 = vpop.permute.xlu0 %2082
    %2084 = vrot.lane.b32.xlu0 %v1122, 96
    %v2085 = vpop.permute.xlu0 %2084
    %2086 = vrot.lane.b32.xlu0 %v1123, 96
    %v2087 = vpop.permute.xlu0 %2086
    %2088 = vrot.lane.b32.xlu0 %v1124, 96
    %v2089 = vpop.permute.xlu0 %2088
    %2090 = vrot.lane.b32.xlu0 %v1125, 96
    %v2091 = vpop.permute.xlu0 %2090
    %2092 = vrot.lane.b32.xlu0 %v1126, 96
    %v2093 = vpop.permute.xlu0 %2092
    %2094 = vrot.lane.b32.xlu0 %v1127, 96
    %v2095 = vpop.permute.xlu0 %2094
    %2096 = vrot.lane.b32.xlu0 %v1128, 96
    %v2097 = vpop.permute.xlu0 %2096
    %2098 = vrot.lane.b32.xlu0 %v1129, 96
    %v2099 = vpop.permute.xlu0 %2098
    %2100 = vrot.lane.b32.xlu0 %v1130, 96
    %v2101 = vpop.permute.xlu0 %2100
    %v2134 = vsel %vm132, %v1847, %v1943
    %v2135 = vsel %vm132, %v1849, %v1945
    %v2136 = vsel %vm132, %v1851, %v1947
    %v2137 = vsel %vm132, %v1853, %v1949
    %v2138 = vsel %vm132, %v1855, %v1951
    %v2139 = vsel %vm132, %v1857, %v1953
    %v2140 = vsel %vm132, %v1859, %v1955
    %v2141 = vsel %vm132, %v1861, %v1957
    %v2142 = vsel %vm132, %v1863, %v1959
    %v2143 = vsel %vm132, %v1865, %v1961
    %v2144 = vsel %vm132, %v1867, %v1963
    %v2145 = vsel %vm132, %v1869, %v1965
    %v2146 = vsel %vm132, %v1871, %v1967
    %v2147 = vsel %vm132, %v1873, %v1969
    %v2148 = vsel %vm132, %v1875, %v1971
    %v2149 = vsel %vm132, %v1877, %v1973
    %v2150 = vsel %vm132, %v1879, %v1975
    %v2151 = vsel %vm132, %v1881, %v1977
    %v2152 = vsel %vm132, %v1883, %v1979
    %v2153 = vsel %vm132, %v1885, %v1981
    %v2154 = vsel %vm132, %v1887, %v1983
    %v2155 = vsel %vm132, %v1889, %v1985
    %v2156 = vsel %vm132, %v1891, %v1987
    %v2157 = vsel %vm132, %v1893, %v1989
    %v2158 = vsel %vm132, %v1895, %v1991
    %v2159 = vsel %vm132, %v1897, %v1993
    %v2160 = vsel %vm132, %v1899, %v1995
    %v2161 = vsel %vm132, %v1901, %v1997
    %v2162 = vsel %vm132, %v1903, %v1999
    %v2163 = vsel %vm132, %v1905, %v2001
    %v2164 = vsel %vm132, %v1907, %v2003
    %v2165 = vsel %vm132, %v1909, %v2005
    %vm2166 = vcmask 654336
    %v2167 = vsel %vm2166, %v2134, %v1943
    %v2168 = vsel %vm2166, %v2135, %v1945
    %v2169 = vsel %vm2166, %v2136, %v1947
    %v2170 = vsel %vm2166, %v2137, %v1949
    %v2171 = vsel %vm2166, %v2138, %v1951
    %v2172 = vsel %vm2166, %v2139, %v1953
    %v2173 = vsel %vm2166, %v2140, %v1955
    %v2174 = vsel %vm2166, %v2141, %v1957
    %v2175 = vsel %vm2166, %v2142, %v1959
    %v2176 = vsel %vm2166, %v2143, %v1961
    %v2177 = vsel %vm2166, %v2144, %v1963
    %v2178 = vsel %vm2166, %v2145, %v1965
    %v2179 = vsel %vm2166, %v2146, %v1967
    %v2180 = vsel %vm2166, %v2147, %v1969
    %v2181 = vsel %vm2166, %v2148, %v1971
    %v2182 = vsel %vm2166, %v2149, %v1973
    %v2183 = vsel %vm2166, %v2150, %v1975
    %v2184 = vsel %vm2166, %v2151, %v1977
    %v2185 = vsel %vm2166, %v2152, %v1979
    %v2186 = vsel %vm2166, %v2153, %v1981
    %v2187 = vsel %vm2166, %v2154, %v1983
    %v2188 = vsel %vm2166, %v2155, %v1985
    %v2189 = vsel %vm2166, %v2156, %v1987
    %v2190 = vsel %vm2166, %v2157, %v1989
    %v2191 = vsel %vm2166, %v2158, %v1991
    %v2192 = vsel %vm2166, %v2159, %v1993
    %v2193 = vsel %vm2166, %v2160, %v1995
    %v2194 = vsel %vm2166, %v2161, %v1997
    %v2195 = vsel %vm2166, %v2162, %v1999
    %v2196 = vsel %vm2166, %v2163, %v2001
    %v2197 = vsel %vm2166, %v2164, %v2003
    %v2198 = vsel %vm2166, %v2165, %v2005
    %vm2199 = vcmask 785408
    %v2200 = vsel %vm2199, %v2167, %v2039
    %v2201 = vsel %vm2199, %v2168, %v2041
    %v2202 = vsel %vm2199, %v2169, %v2043
    %v2203 = vsel %vm2199, %v2170, %v2045
    %v2204 = vsel %vm2199, %v2171, %v2047
    %v2205 = vsel %vm2199, %v2172, %v2049
    %v2206 = vsel %vm2199, %v2173, %v2051
    %v2207 = vsel %vm2199, %v2174, %v2053
    %v2208 = vsel %vm2199, %v2175, %v2055
    %v2209 = vsel %vm2199, %v2176, %v2057
    %v2210 = vsel %vm2199, %v2177, %v2059
    %v2211 = vsel %vm2199, %v2178, %v2061
    %v2212 = vsel %vm2199, %v2179, %v2063
    %v2213 = vsel %vm2199, %v2180, %v2065
    %v2214 = vsel %vm2199, %v2181, %v2067
    %v2215 = vsel %vm2199, %v2182, %v2069
    %v2216 = vsel %vm2199, %v2183, %v2071
    %v2217 = vsel %vm2199, %v2184, %v2073
    %v2218 = vsel %vm2199, %v2185, %v2075
    %v2219 = vsel %vm2199, %v2186, %v2077
    %v2220 = vsel %vm2199, %v2187, %v2079
    %v2221 = vsel %vm2199, %v2188, %v2081
    %v2222 = vsel %vm2199, %v2189, %v2083
    %v2223 = vsel %vm2199, %v2190, %v2085
    %v2224 = vsel %vm2199, %v2191, %v2087
    %v2225 = vsel %vm2199, %v2192, %v2089
    %v2226 = vsel %vm2199, %v2193, %v2091
    %v2227 = vsel %vm2199, %v2194, %v2093
    %v2228 = vsel %vm2199, %v2195, %v2095
    %v2229 = vsel %vm2199, %v2196, %v2097
    %v2230 = vsel %vm2199, %v2197, %v2099
    %v2231 = vsel %vm2199, %v2198, %v2101
    %vm2232 = vcmask 916480
    %v2233 = vsel %vm2232, %v2200, 0.0
    %v2234 = vsel %vm2232, %v2201, 0.0
    %v2235 = vsel %vm2232, %v2202, 0.0
    %v2236 = vsel %vm2232, %v2203, 0.0
    %v2237 = vsel %vm2232, %v2204, 0.0
    %v2238 = vsel %vm2232, %v2205, 0.0
    %v2239 = vsel %vm2232, %v2206, 0.0
    %v2240 = vsel %vm2232, %v2207, 0.0
    %v2241 = vsel %vm2232, %v2208, 0.0
    %v2242 = vsel %vm2232, %v2209, 0.0
    %v2243 = vsel %vm2232, %v2210, 0.0
    %v2244 = vsel %vm2232, %v2211, 0.0
    %v2245 = vsel %vm2232, %v2212, 0.0
    %v2246 = vsel %vm2232, %v2213, 0.0
    %v2247 = vsel %vm2232, %v2214, 0.0
    %v2248 = vsel %vm2232, %v2215, 0.0
    %v2249 = vsel %vm2232, %v2216, 0.0
    %v2250 = vsel %vm2232, %v2217, 0.0
    %v2251 = vsel %vm2232, %v2218, 0.0
    %v2252 = vsel %vm2232, %v2219, 0.0
    %v2253 = vsel %vm2232, %v2220, 0.0
    %v2254 = vsel %vm2232, %v2221, 0.0
    %v2255 = vsel %vm2232, %v2222, 0.0
    %v2256 = vsel %vm2232, %v2223, 0.0
    %v2257 = vsel %vm2232, %v2224, 0.0
    %v2258 = vsel %vm2232, %v2225, 0.0
    %v2259 = vsel %vm2232, %v2226, 0.0
    %v2260 = vsel %vm2232, %v2227, 0.0
    %v2261 = vsel %vm2232, %v2228, 0.0
    %v2262 = vsel %vm2232, %v2229, 0.0
    %v2263 = vsel %vm2232, %v2230, 0.0
    %v2264 = vsel %vm2232, %v2231, 0.0
    %2265 = vst [vmem:[#allocation2] sm:$0xff] %v2233
    %2266 = vst [vmem:[#allocation2 + $0x8] sm:$0xff] %v2234
    %2267 = vst [vmem:[#allocation2 + $0x10] sm:$0xff] %v2235
    %2268 = vst [vmem:[#allocation2 + $0x18] sm:$0xff] %v2236
    %2269 = vst [vmem:[#allocation2 + $0x20] sm:$0xff] %v2237
    %2270 = vst [vmem:[#allocation2 + $0x28] sm:$0xff] %v2238
    %2271 = vst [vmem:[#allocation2 + $0x30] sm:$0xff] %v2239
    %2272 = vst [vmem:[#allocation2 + $0x38] sm:$0xff] %v2240
    %2273 = vst [vmem:[#allocation2 + $0x40] sm:$0xff] %v2241
    %2274 = vst [vmem:[#allocation2 + $0x48] sm:$0xff] %v2242
    %2275 = vst [vmem:[#allocation2 + $0x50] sm:$0xff] %v2243
    %2276 = vst [vmem:[#allocation2 + $0x58] sm:$0xff] %v2244
    %2277 = vst [vmem:[#allocation2 + $0x60] sm:$0xff] %v2245
    %2278 = vst [vmem:[#allocation2 + $0x68] sm:$0xff] %v2246
    %2279 = vst [vmem:[#allocation2 + $0x70] sm:$0xff] %v2247
    %2280 = vst [vmem:[#allocation2 + $0x78] sm:$0xff] %v2248
    %2281 = vst [vmem:[#allocation2 + $0x80] sm:$0xff] %v2249
    %2282 = vst [vmem:[#allocation2 + $0x88] sm:$0xff] %v2250
    %2283 = vst [vmem:[#allocation2 + $0x90] sm:$0xff] %v2251
    %2284 = vst [vmem:[#allocation2 + $0x98] sm:$0xff] %v2252
    %2285 = vst [vmem:[#allocation2 + $0xa0] sm:$0xff] %v2253
    %2286 = vst [vmem:[#allocation2 + $0xa8] sm:$0xff] %v2254
    %2287 = vst [vmem:[#allocation2 + $0xb0] sm:$0xff] %v2255
    %2288 = vst [vmem:[#allocation2 + $0xb8] sm:$0xff] %v2256
    %2289 = vst [vmem:[#allocation2 + $0xc0] sm:$0xff] %v2257
    %2290 = vst [vmem:[#allocation2 + $0xc8] sm:$0xff] %v2258
    %2291 = vst [vmem:[#allocation2 + $0xd0] sm:$0xff] %v2259
    %2292 = vst [vmem:[#allocation2 + $0xd8] sm:$0xff] %v2260
    %2293 = vst [vmem:[#allocation2 + $0xe0] sm:$0xff] %v2261
    %2294 = vst [vmem:[#allocation2 + $0xe8] sm:$0xff] %v2262
    %2295 = vst [vmem:[#allocation2 + $0xf0] sm:$0xff] %v2263
    %2296 = vst [vmem:[#allocation2 + $0xf8] sm:$0xff] %v2264
    // Predicated region
    $region18: #{tpu_custom_call.1} parent=1 // pred_check
      _
    $region19: #{tpu_custom_call.1} parent=1 // pred_check_branch
      %2298 = sbr.rel (0) target = $region21
    $region20: #{tpu_custom_call.1} parent=1 // pred_region
      %s2300 = ssub.s32 4096, 4096
      %2301 = vsyncadd [#allocation3], %s2300
      %s2302 = sshll.u32 [#allocation2], 4
      %s2303 = int_to_ptr.vmem [resolvable:$true] %s2302
      %2308 = dma.vmem_to_hbm [thread:$0]  %s2303, 4096, %s4, [#allocation3], 128, 128, 8
    $region21: #{tpu_custom_call.1} parent=1 // pred_fallthru
      _
    // Predicated region
    $region22: #{tpu_custom_call.1} parent=1 // pred_check
      _
    $region23: #{tpu_custom_call.1} parent=1 // pred_check_branch
      %2310 = sbr.rel (0) target = $region25
    $region24: #{tpu_custom_call.1} parent=1 // pred_region
      %2311 = dma.done [#allocation3], 4096
    $region25: #{tpu_custom_call.1} parent=1 // pred_fallthru
      _
    %2312 = vsyncpa [#allocation3], 1

</llo_original>
